<compile_context>
chip_gen: v7x
topology: tpu7x:2x2x1
jax: 0.10.0
libtpu: 0.0.40
codegen_flags: <defaults>
</compile_context>

<pallas_src>
import math

import jax
import jax.numpy as jnp
from jax import lax
from jax.experimental import pallas as pl
from jax.experimental.pallas import tpu as pltpu


def _fused_enc_dec_kernel(x_ref, e_wih_ref, e_b_ref, e_whh_ref, dec_w_ref,
                          d_b_ref, enc_out_ref, dec_out_ref, xg_ref):
    """Fused encoder+decoder LSTM recurrence, fully VMEM-resident.

    x_ref     : (S*Bp, D)      raw input, flattened over (time, batch)
    e_wih_ref : (D, 4*He)      encoder input weights (pre-transposed)
    e_b_ref   : (1, 4*He)      encoder fused bias
    e_whh_ref : (He, 4*He)     encoder recurrent weights (pre-transposed)
    dec_w_ref : (He+Hd, 4*Hd)  decoder fused [W_ih ; W_hh] (pre-transposed)
    d_b_ref   : (1, 4*Hd)      decoder fused bias
    enc_out_ref: (S, Bp, He),  dec_out_ref: (S, Bp, Hd)
    xg_ref    : (S*Bp, 4*He)   VMEM scratch for the hoisted input projection
    """
    S = enc_out_ref.shape[0]
    Bp = enc_out_ref.shape[1]
    He = e_whh_ref.shape[0]
    Hd = dec_w_ref.shape[1] // 4

    # ---- hoisted encoder input projection: ONE big MXU matmul, done once.
    xg_ref[...] = (jnp.dot(x_ref[...], e_wih_ref[...],
                           preferred_element_type=jnp.float32)
                   + e_b_ref[...])

    # Loop-invariant VMEM residents, loaded once; decoder bias broadcast
    # hoisted out of the (unrolled) recurrence.
    e_whh = e_whh_ref[...]
    dec_w = dec_w_ref[...]
    d_b = jnp.broadcast_to(d_b_ref[...], (Bp, 4 * Hd))

    def lstm_cell(gates, c, H):
        # PyTorch gate order: i, f, g, o.
        # NOTE(v6e/v7x): non-128-aligned lane slices go through the XLU; at
        # He<=32 this is cheap, revisit with bundle counts if H grows.
        i = jax.nn.sigmoid(gates[:, 0 * H:1 * H])
        f = jax.nn.sigmoid(gates[:, 1 * H:2 * H])
        g = jnp.tanh(gates[:, 2 * H:3 * H])
        o = jax.nn.sigmoid(gates[:, 3 * H:4 * H])
        c_new = f * c + i * g
        h_new = o * jnp.tanh(c_new)
        return h_new, c_new

    def body(t, carry):
        h_e, c_e, h_d, c_d = carry

        # ---- encoder step: only h @ W_hh remains in the recurrence.
        row = pl.multiple_of(t * Bp, Bp)
        xg_t = xg_ref[pl.ds(row, Bp), :]                         # (Bp, 4He)
        gates_e = xg_t + jnp.dot(h_e, e_whh,
                                 preferred_element_type=jnp.float32)
        h_e, c_e = lstm_cell(gates_e, c_e, He)

        # ---- decoder step: single fused matmul over [h_e | h_d] (K=He+Hd).
        h_cat = jnp.concatenate([h_e, h_d], axis=1)              # (Bp, He+Hd)
        gates_d = jnp.dot(h_cat, dec_w,
                          preferred_element_type=jnp.float32) + d_b
        h_d, c_d = lstm_cell(gates_d, c_d, Hd)

        # Clean first-axis stores into VMEM-resident outputs.
        enc_out_ref[t] = h_e
        dec_out_ref[t] = h_d
        return (h_e, c_e, h_d, c_d)

    init = (jnp.zeros((Bp, He), jnp.float32),
            jnp.zeros((Bp, He), jnp.float32),
            jnp.zeros((Bp, Hd), jnp.float32),
            jnp.zeros((Bp, Hd), jnp.float32))
    # Capped unroll: full unroll at small S (lets the LLO scheduler overlap
    # decoder(t) with encoder(t+1)), bounded if S grows.
    lax.fori_loop(0, S, body, init, unroll=max(1, min(S, 8)))


def _fused_call(x_flat, e_wih_t, e_b, e_whh_t, dec_w_cat, d_b, S, Bp, He, Hd):
    D = x_flat.shape[1]
    vmem = pl.BlockSpec(memory_space=pltpu.MemorySpace.VMEM)

    flops = (2 * S * Bp * D * 4 * He            # hoisted input projection
             + 2 * S * Bp * He * 4 * He         # encoder recurrent matmul
             + 2 * S * Bp * (He + Hd) * 4 * Hd)  # fused decoder matmul
    transcendentals = S * Bp * 5 * (He + Hd)     # 3 sigmoid + 2 tanh per unit
    bytes_accessed = 4 * (x_flat.size + e_wih_t.size + e_b.size + e_whh_t.size
                          + dec_w_cat.size + d_b.size
                          + S * Bp * He + S * Bp * Hd)

    return pl.pallas_call(
        _fused_enc_dec_kernel,
        out_shape=(jax.ShapeDtypeStruct((S, Bp, He), jnp.float32),
                   jax.ShapeDtypeStruct((S, Bp, Hd), jnp.float32)),
        in_specs=[vmem] * 6,
        out_specs=(vmem, vmem),
        scratch_shapes=[pltpu.VMEM((S * Bp, 4 * He), jnp.float32)],
        compiler_params=pltpu.CompilerParams(
            vmem_limit_bytes=64 * 1024 * 1024),
        cost_estimate=pl.CostEstimate(flops=flops,
                                      transcendentals=transcendentals,
                                      bytes_accessed=bytes_accessed),
    )(x_flat, e_wih_t, e_b, e_whh_t, dec_w_cat, d_b)


def contractive_lstm_autoencoder(inp, enc_params, dec_params):
    """forward(inp) -> (enc_out, dec_out), inp: (S, B, D_in), time-major."""
    e_wih_t, e_whh_t, e_b = enc_params
    d_wih_t, d_whh_t, d_b = dec_params
    S, B, D = inp.shape
    He = e_whh_t.shape[0]
    Hd = d_whh_t.shape[0]

    # Pad batch to the f32 sublane quantum (8); padded rows are independent
    # (bias-driven garbage) and sliced off below.
    Bp = max(8, ((B + 7) // 8) * 8)
    x_p = inp.astype(jnp.float32)
    if Bp != B:
        x_p = jnp.pad(x_p, ((0, 0), (0, Bp - B), (0, 0)))
    x_flat = x_p.reshape(S * Bp, D)          # contiguous, metadata-only reshape

    # Fused decoder weight [W_ih ; W_hh]: one matmul per step instead of two.
    dec_w_cat = jnp.concatenate([d_wih_t, d_whh_t], axis=0)     # (He+Hd, 4Hd)

    enc_p, dec_p = _fused_call(x_flat, e_wih_t, e_b, e_whh_t, dec_w_cat, d_b,
                               S, Bp, He, Hd)
    enc_out = enc_p[:, :B, :].astype(inp.dtype)
    dec_out = dec_p[:, :B, :].astype(inp.dtype)
    return enc_out, dec_out


def lstm_ref(x, w_ih_t, w_hh_t, bias):
    """Pure-JAX reference of torch.nn.LSTM forward (single layer, zero init)."""
    S, B, D = x.shape
    H = w_hh_t.shape[0]

    def step(carry, x_t):
        h, c = carry
        gates = x_t @ w_ih_t + h @ w_hh_t + bias
        i = jax.nn.sigmoid(gates[:, 0 * H:1 * H])
        f = jax.nn.sigmoid(gates[:, 1 * H:2 * H])
        g = jnp.tanh(gates[:, 2 * H:3 * H])
        o = jax.nn.sigmoid(gates[:, 3 * H:4 * H])
        c = f * c + i * g
        h = o * jnp.tanh(c)
        return (h, c), h

    init = (jnp.zeros((B, H), jnp.float32), jnp.zeros((B, H), jnp.float32))
    _, ys = lax.scan(step, init, x)
    return ys


def init_lstm_params(key, input_size, hidden_size):
    """Deterministic init mimicking torch.nn.LSTM (U(-1/sqrt(H), 1/sqrt(H)))."""
    k = 1.0 / math.sqrt(hidden_size)
    k1, k2, k3, k4 = jax.random.split(key, 4)
    w_ih = jax.random.uniform(k1, (4 * hidden_size, input_size), jnp.float32, -k, k)
    w_hh = jax.random.uniform(k2, (4 * hidden_size, hidden_size), jnp.float32, -k, k)
    b_ih = jax.random.uniform(k3, (4 * hidden_size,), jnp.float32, -k, k)
    b_hh = jax.random.uniform(k4, (4 * hidden_size,), jnp.float32, -k, k)
    # Pre-transpose weights, fuse biases (glue, outside the kernel).
    return w_ih.T, w_hh.T, (b_ih + b_hh)[None, :]


if __name__ == "__main__":
    # eparams: input_size=16, hidden_size=32 ; dparams: input_size=32, hidden_size=16
    SEQ, BATCH, D_IN, H_ENC, H_DEC = 8, 2, 16, 32, 16

    root = jax.random.PRNGKey(0)
    k_x, k_enc, k_dec = jax.random.split(root, 3)

    x = jax.random.normal(k_x, (SEQ, BATCH, D_IN), jnp.float32)
    enc_params = init_lstm_params(k_enc, D_IN, H_ENC)
    dec_params = init_lstm_params(k_dec, H_ENC, H_DEC)

    fwd = jax.jit(contractive_lstm_autoencoder)
    enc_out, dec_out = fwd(x, enc_params, dec_params)
    jax.block_until_ready((enc_out, dec_out))

    # Correctness check against pure-JAX LSTM reference (f32 path, tight tol).
    enc_ref = lstm_ref(x, *enc_params)
    dec_ref = lstm_ref(enc_ref, *dec_params)
    assert enc_out.shape == (SEQ, BATCH, H_ENC)
    assert dec_out.shape == (SEQ, BATCH, H_DEC)
    assert jnp.allclose(enc_out, enc_ref, atol=1e-5, rtol=1e-5)
    assert jnp.allclose(dec_out, dec_ref, atol=1e-5, rtol=1e-5)

    print("KERNEL_OK")
</pallas_src>

<mosaic_0001>
module attributes {stable_mosaic.version = 11 : i64} {
  func.func @_fused_enc_dec_kernel(%arg0: memref<64x16xf32, #tpu.memory_space<vmem>>, %arg1: memref<16x128xf32, #tpu.memory_space<vmem>>, %arg2: memref<1x128xf32, #tpu.memory_space<vmem>>, %arg3: memref<32x128xf32, #tpu.memory_space<vmem>>, %arg4: memref<48x64xf32, #tpu.memory_space<vmem>>, %arg5: memref<1x64xf32, #tpu.memory_space<vmem>>, %arg6: memref<8x8x32xf32, #tpu.memory_space<vmem>>, %arg7: memref<8x8x16xf32, #tpu.memory_space<vmem>>, %arg8: memref<64x128xf32, #tpu.memory_space<vmem>>) attributes {dimension_semantics = [], scalar_prefetch = 0 : i64, scratch_operands = 1 : i64, tpu.core_type = #tpu.core_type<tc>} {
    %c0 = arith.constant 0 : index
    %c0_0 = arith.constant 0 : index
    %0 = vector.load %arg0[%c0, %c0_0] : memref<64x16xf32, #tpu.memory_space<vmem>>, vector<64x16xf32>
    %c0_1 = arith.constant 0 : index
    %c0_2 = arith.constant 0 : index
    %1 = vector.load %arg1[%c0_1, %c0_2] : memref<16x128xf32, #tpu.memory_space<vmem>>, vector<16x128xf32>
    %cst = arith.constant dense<0.000000e+00> : vector<64x128xf32>
    %2 = tpu.matmul %0, %1, %cst {dimension_numbers = #tpu.dot_dimension_numbers<[1], [0], [0], [1], [0, 0, 1, 1], [], []>} : vector<64x16xf32>, vector<16x128xf32>, vector<64x128xf32> -> vector<64x128xf32>
    %c0_3 = arith.constant 0 : index
    %c0_4 = arith.constant 0 : index
    %3 = vector.load %arg2[%c0_3, %c0_4] : memref<1x128xf32, #tpu.memory_space<vmem>>, vector<1x128xf32>
    %4 = vector.broadcast %3 : vector<1x128xf32> to vector<64x128xf32>
    %5 = arith.addf %2, %4 : vector<64x128xf32>
    %c0_5 = arith.constant 0 : index
    %c0_6 = arith.constant 0 : index
    %6 = vector.load %arg8[%c0_5, %c0_6] : memref<64x128xf32, #tpu.memory_space<vmem>>, vector<64x128xf32>
    tpu.vector_store %arg8[%c0_5, %c0_6], %5 {strides = array<i32>} : memref<64x128xf32, #tpu.memory_space<vmem>>, vector<64x128xf32>,
    %c0_7 = arith.constant 0 : index
    %c0_8 = arith.constant 0 : index
    %7 = vector.load %arg3[%c0_7, %c0_8] : memref<32x128xf32, #tpu.memory_space<vmem>>, vector<32x128xf32>
    %c0_9 = arith.constant 0 : index
    %c0_10 = arith.constant 0 : index
    %8 = vector.load %arg4[%c0_9, %c0_10] : memref<48x64xf32, #tpu.memory_space<vmem>>, vector<48x64xf32>
    %c0_11 = arith.constant 0 : index
    %c0_12 = arith.constant 0 : index
    %9 = vector.load %arg5[%c0_11, %c0_12] : memref<1x64xf32, #tpu.memory_space<vmem>>, vector<1x64xf32>
    %10 = vector.shape_cast %9 : vector<1x64xf32> to vector<1x64xf32>
    %11 = vector.broadcast %10 : vector<1x64xf32> to vector<8x64xf32>
    %cst_13 = arith.constant 0.000000e+00 : f32
    %12 = vector.broadcast %cst_13 : f32 to vector<8x32xf32>
    %cst_14 = arith.constant 0.000000e+00 : f32
    %13 = vector.broadcast %cst_14 : f32 to vector<8x32xf32>
    %cst_15 = arith.constant 0.000000e+00 : f32
    %14 = vector.broadcast %cst_15 : f32 to vector<8x16xf32>
    %cst_16 = arith.constant 0.000000e+00 : f32
    %15 = vector.broadcast %cst_16 : f32 to vector<8x16xf32>
    %c0_i32 = arith.constant 0 : i32
    %c8_i32 = arith.constant 8 : i32
    %16 = arith.muli %c0_i32, %c8_i32 : i32
    %17 = tpu.assume_multiple %16, 8 : i32
    %18 = arith.index_cast %17 : i32 to index
    %c0_17 = arith.constant 0 : index
    %19 = vector.load %arg8[%18, %c0_17] : memref<64x128xf32, #tpu.memory_space<vmem>>, vector<8x128xf32>
    %cst_18 = arith.constant dense<0.000000e+00> : vector<8x128xf32>
    %20 = tpu.matmul %12, %7, %cst_18 {dimension_numbers = #tpu.dot_dimension_numbers<[1], [0], [0], [1], [0, 0, 1, 1], [], []>} : vector<8x32xf32>, vector<32x128xf32>, vector<8x128xf32> -> vector<8x128xf32>
    %21 = arith.addf %19, %20 : vector<8x128xf32>
    %22 = vector.extract_strided_slice %21 {offsets = [0, 0], sizes = [8, 32], strides = [1, 1]} : vector<8x128xf32> to vector<8x32xf32>
    %23 = arith.negf %22 : vector<8x32xf32>
    %24 = math.exp %23 : vector<8x32xf32>
    %cst_19 = arith.constant 1.000000e+00 : f32
    %25 = vector.broadcast %cst_19 : f32 to vector<8x32xf32>
    %26 = arith.addf %25, %24 : vector<8x32xf32>
    %27 = arith.divf %25, %26 : vector<8x32xf32>
    %28 = vector.extract_strided_slice %21 {offsets = [0, 32], sizes = [8, 32], strides = [1, 1]} : vector<8x128xf32> to vector<8x32xf32>
    %29 = arith.negf %28 : vector<8x32xf32>
    %30 = math.exp %29 : vector<8x32xf32>
    %cst_20 = arith.constant 1.000000e+00 : f32
    %31 = vector.broadcast %cst_20 : f32 to vector<8x32xf32>
    %32 = arith.addf %31, %30 : vector<8x32xf32>
    %33 = arith.divf %31, %32 : vector<8x32xf32>
    %34 = vector.extract_strided_slice %21 {offsets = [0, 64], sizes = [8, 32], strides = [1, 1]} : vector<8x128xf32> to vector<8x32xf32>
    %35 = math.tanh %34 : vector<8x32xf32>
    %36 = vector.extract_strided_slice %21 {offsets = [0, 96], sizes = [8, 32], strides = [1, 1]} : vector<8x128xf32> to vector<8x32xf32>
    %37 = arith.negf %36 : vector<8x32xf32>
    %38 = math.exp %37 : vector<8x32xf32>
    %cst_21 = arith.constant 1.000000e+00 : f32
    %39 = vector.broadcast %cst_21 : f32 to vector<8x32xf32>
    %40 = arith.addf %39, %38 : vector<8x32xf32>
    %41 = arith.divf %39, %40 : vector<8x32xf32>
    %42 = arith.mulf %33, %13 : vector<8x32xf32>
    %43 = arith.mulf %27, %35 : vector<8x32xf32>
    %44 = arith.addf %42, %43 : vector<8x32xf32>
    %45 = math.tanh %44 : vector<8x32xf32>
    %46 = arith.mulf %41, %45 : vector<8x32xf32>
    %47 = tpu.concatenate %46, %14 in 1 : vector<8x32xf32>, vector<8x16xf32> -> vector<8x48xf32>
    %cst_22 = arith.constant dense<0.000000e+00> : vector<8x64xf32>
    %48 = tpu.matmul %47, %8, %cst_22 {dimension_numbers = #tpu.dot_dimension_numbers<[1], [0], [0], [1], [0, 0, 1, 1], [], []>} : vector<8x48xf32>, vector<48x64xf32>, vector<8x64xf32> -> vector<8x64xf32>
    %49 = arith.addf %48, %11 : vector<8x64xf32>
    %50 = vector.extract_strided_slice %49 {offsets = [0, 0], sizes = [8, 16], strides = [1, 1]} : vector<8x64xf32> to vector<8x16xf32>
    %51 = arith.negf %50 : vector<8x16xf32>
    %52 = math.exp %51 : vector<8x16xf32>
    %cst_23 = arith.constant 1.000000e+00 : f32
    %53 = vector.broadcast %cst_23 : f32 to vector<8x16xf32>
    %54 = arith.addf %53, %52 : vector<8x16xf32>
    %55 = arith.divf %53, %54 : vector<8x16xf32>
    %56 = vector.extract_strided_slice %49 {offsets = [0, 16], sizes = [8, 16], strides = [1, 1]} : vector<8x64xf32> to vector<8x16xf32>
    %57 = arith.negf %56 : vector<8x16xf32>
    %58 = math.exp %57 : vector<8x16xf32>
    %cst_24 = arith.constant 1.000000e+00 : f32
    %59 = vector.broadcast %cst_24 : f32 to vector<8x16xf32>
    %60 = arith.addf %59, %58 : vector<8x16xf32>
    %61 = arith.divf %59, %60 : vector<8x16xf32>
    %62 = vector.extract_strided_slice %49 {offsets = [0, 32], sizes = [8, 16], strides = [1, 1]} : vector<8x64xf32> to vector<8x16xf32>
    %63 = math.tanh %62 : vector<8x16xf32>
    %64 = vector.extract_strided_slice %49 {offsets = [0, 48], sizes = [8, 16], strides = [1, 1]} : vector<8x64xf32> to vector<8x16xf32>
    %65 = arith.negf %64 : vector<8x16xf32>
    %66 = math.exp %65 : vector<8x16xf32>
    %cst_25 = arith.constant 1.000000e+00 : f32
    %67 = vector.broadcast %cst_25 : f32 to vector<8x16xf32>
    %68 = arith.addf %67, %66 : vector<8x16xf32>
    %69 = arith.divf %67, %68 : vector<8x16xf32>
    %70 = arith.mulf %61, %15 : vector<8x16xf32>
    %71 = arith.mulf %55, %63 : vector<8x16xf32>
    %72 = arith.addf %70, %71 : vector<8x16xf32>
    %73 = math.tanh %72 : vector<8x16xf32>
    %74 = arith.mulf %69, %73 : vector<8x16xf32>
    %75 = arith.index_cast %c0_i32 : i32 to index
    %c0_26 = arith.constant 0 : index
    %c0_27 = arith.constant 0 : index
    %76 = vector.load %arg6[%75, %c0_26, %c0_27] : memref<8x8x32xf32, #tpu.memory_space<vmem>>, vector<1x8x32xf32>
    %77 = vector.shape_cast %76 : vector<1x8x32xf32> to vector<8x32xf32>
    %78 = vector.shape_cast %46 : vector<8x32xf32> to vector<1x8x32xf32>
    tpu.vector_store %arg6[%75, %c0_26, %c0_27], %78 {strides = array<i32>} : memref<8x8x32xf32, #tpu.memory_space<vmem>>, vector<1x8x32xf32>,
    %79 = arith.index_cast %c0_i32 : i32 to index
    %c0_28 = arith.constant 0 : index
    %c0_29 = arith.constant 0 : index
    %80 = vector.load %arg7[%79, %c0_28, %c0_29] : memref<8x8x16xf32, #tpu.memory_space<vmem>>, vector<1x8x16xf32>
    %81 = vector.shape_cast %80 : vector<1x8x16xf32> to vector<8x16xf32>
    %82 = vector.shape_cast %74 : vector<8x16xf32> to vector<1x8x16xf32>
    tpu.vector_store %arg7[%79, %c0_28, %c0_29], %82 {strides = array<i32>} : memref<8x8x16xf32, #tpu.memory_space<vmem>>, vector<1x8x16xf32>,
    %c1_i32 = arith.constant 1 : i32
    %c8_i32_30 = arith.constant 8 : i32
    %83 = arith.muli %c1_i32, %c8_i32_30 : i32
    %84 = tpu.assume_multiple %83, 8 : i32
    %85 = arith.index_cast %84 : i32 to index
    %c0_31 = arith.constant 0 : index
    %86 = vector.load %arg8[%85, %c0_31] : memref<64x128xf32, #tpu.memory_space<vmem>>, vector<8x128xf32>
    %cst_32 = arith.constant dense<0.000000e+00> : vector<8x128xf32>
    %87 = tpu.matmul %46, %7, %cst_32 {dimension_numbers = #tpu.dot_dimension_numbers<[1], [0], [0], [1], [0, 0, 1, 1], [], []>} : vector<8x32xf32>, vector<32x128xf32>, vector<8x128xf32> -> vector<8x128xf32>
    %88 = arith.addf %86, %87 : vector<8x128xf32>
    %89 = vector.extract_strided_slice %88 {offsets = [0, 0], sizes = [8, 32], strides = [1, 1]} : vector<8x128xf32> to vector<8x32xf32>
    %90 = arith.negf %89 : vector<8x32xf32>
    %91 = math.exp %90 : vector<8x32xf32>
    %cst_33 = arith.constant 1.000000e+00 : f32
    %92 = vector.broadcast %cst_33 : f32 to vector<8x32xf32>
    %93 = arith.addf %92, %91 : vector<8x32xf32>
    %94 = arith.divf %92, %93 : vector<8x32xf32>
    %95 = vector.extract_strided_slice %88 {offsets = [0, 32], sizes = [8, 32], strides = [1, 1]} : vector<8x128xf32> to vector<8x32xf32>
    %96 = arith.negf %95 : vector<8x32xf32>
    %97 = math.exp %96 : vector<8x32xf32>
    %cst_34 = arith.constant 1.000000e+00 : f32
    %98 = vector.broadcast %cst_34 : f32 to vector<8x32xf32>
    %99 = arith.addf %98, %97 : vector<8x32xf32>
    %100 = arith.divf %98, %99 : vector<8x32xf32>
    %101 = vector.extract_strided_slice %88 {offsets = [0, 64], sizes = [8, 32], strides = [1, 1]} : vector<8x128xf32> to vector<8x32xf32>
    %102 = math.tanh %101 : vector<8x32xf32>
    %103 = vector.extract_strided_slice %88 {offsets = [0, 96], sizes = [8, 32], strides = [1, 1]} : vector<8x128xf32> to vector<8x32xf32>
    %104 = arith.negf %103 : vector<8x32xf32>
    %105 = math.exp %104 : vector<8x32xf32>
    %cst_35 = arith.constant 1.000000e+00 : f32
    %106 = vector.broadcast %cst_35 : f32 to vector<8x32xf32>
    %107 = arith.addf %106, %105 : vector<8x32xf32>
    %108 = arith.divf %106, %107 : vector<8x32xf32>
    %109 = arith.mulf %100, %44 : vector<8x32xf32>
    %110 = arith.mulf %94, %102 : vector<8x32xf32>
    %111 = arith.addf %109, %110 : vector<8x32xf32>
    %112 = math.tanh %111 : vector<8x32xf32>
    %113 = arith.mulf %108, %112 : vector<8x32xf32>
    %114 = tpu.concatenate %113, %74 in 1 : vector<8x32xf32>, vector<8x16xf32> -> vector<8x48xf32>
    %cst_36 = arith.constant dense<0.000000e+00> : vector<8x64xf32>
    %115 = tpu.matmul %114, %8, %cst_36 {dimension_numbers = #tpu.dot_dimension_numbers<[1], [0], [0], [1], [0, 0, 1, 1], [], []>} : vector<8x48xf32>, vector<48x64xf32>, vector<8x64xf32> -> vector<8x64xf32>
    %116 = arith.addf %115, %11 : vector<8x64xf32>
    %117 = vector.extract_strided_slice %116 {offsets = [0, 0], sizes = [8, 16], strides = [1, 1]} : vector<8x64xf32> to vector<8x16xf32>
    %118 = arith.negf %117 : vector<8x16xf32>
    %119 = math.exp %118 : vector<8x16xf32>
    %cst_37 = arith.constant 1.000000e+00 : f32
    %120 = vector.broadcast %cst_37 : f32 to vector<8x16xf32>
    %121 = arith.addf %120, %119 : vector<8x16xf32>
    %122 = arith.divf %120, %121 : vector<8x16xf32>
    %123 = vector.extract_strided_slice %116 {offsets = [0, 16], sizes = [8, 16], strides = [1, 1]} : vector<8x64xf32> to vector<8x16xf32>
    %124 = arith.negf %123 : vector<8x16xf32>
    %125 = math.exp %124 : vector<8x16xf32>
    %cst_38 = arith.constant 1.000000e+00 : f32
    %126 = vector.broadcast %cst_38 : f32 to vector<8x16xf32>
    %127 = arith.addf %126, %125 : vector<8x16xf32>
    %128 = arith.divf %126, %127 : vector<8x16xf32>
    %129 = vector.extract_strided_slice %116 {offsets = [0, 32], sizes = [8, 16], strides = [1, 1]} : vector<8x64xf32> to vector<8x16xf32>
    %130 = math.tanh %129 : vector<8x16xf32>
    %131 = vector.extract_strided_slice %116 {offsets = [0, 48], sizes = [8, 16], strides = [1, 1]} : vector<8x64xf32> to vector<8x16xf32>
    %132 = arith.negf %131 : vector<8x16xf32>
    %133 = math.exp %132 : vector<8x16xf32>
    %cst_39 = arith.constant 1.000000e+00 : f32
    %134 = vector.broadcast %cst_39 : f32 to vector<8x16xf32>
    %135 = arith.addf %134, %133 : vector<8x16xf32>
    %136 = arith.divf %134, %135 : vector<8x16xf32>
    %137 = arith.mulf %128, %72 : vector<8x16xf32>
    %138 = arith.mulf %122, %130 : vector<8x16xf32>
    %139 = arith.addf %137, %138 : vector<8x16xf32>
    %140 = math.tanh %139 : vector<8x16xf32>
    %141 = arith.mulf %136, %140 : vector<8x16xf32>
    %142 = arith.index_cast %c1_i32 : i32 to index
    %c0_40 = arith.constant 0 : index
    %c0_41 = arith.constant 0 : index
    %143 = vector.load %arg6[%142, %c0_40, %c0_41] : memref<8x8x32xf32, #tpu.memory_space<vmem>>, vector<1x8x32xf32>
    %144 = vector.shape_cast %143 : vector<1x8x32xf32> to vector<8x32xf32>
    %145 = vector.shape_cast %113 : vector<8x32xf32> to vector<1x8x32xf32>
    tpu.vector_store %arg6[%142, %c0_40, %c0_41], %145 {strides = array<i32>} : memref<8x8x32xf32, #tpu.memory_space<vmem>>, vector<1x8x32xf32>,
    %146 = arith.index_cast %c1_i32 : i32 to index
    %c0_42 = arith.constant 0 : index
    %c0_43 = arith.constant 0 : index
    %147 = vector.load %arg7[%146, %c0_42, %c0_43] : memref<8x8x16xf32, #tpu.memory_space<vmem>>, vector<1x8x16xf32>
    %148 = vector.shape_cast %147 : vector<1x8x16xf32> to vector<8x16xf32>
    %149 = vector.shape_cast %141 : vector<8x16xf32> to vector<1x8x16xf32>
    tpu.vector_store %arg7[%146, %c0_42, %c0_43], %149 {strides = array<i32>} : memref<8x8x16xf32, #tpu.memory_space<vmem>>, vector<1x8x16xf32>,
    %c2_i32 = arith.constant 2 : i32
    %c8_i32_44 = arith.constant 8 : i32
    %150 = arith.muli %c2_i32, %c8_i32_44 : i32
    %151 = tpu.assume_multiple %150, 8 : i32
    %152 = arith.index_cast %151 : i32 to index
    %c0_45 = arith.constant 0 : index
    %153 = vector.load %arg8[%152, %c0_45] : memref<64x128xf32, #tpu.memory_space<vmem>>, vector<8x128xf32>
    %cst_46 = arith.constant dense<0.000000e+00> : vector<8x128xf32>
    %154 = tpu.matmul %113, %7, %cst_46 {dimension_numbers = #tpu.dot_dimension_numbers<[1], [0], [0], [1], [0, 0, 1, 1], [], []>} : vector<8x32xf32>, vector<32x128xf32>, vector<8x128xf32> -> vector<8x128xf32>
    %155 = arith.addf %153, %154 : vector<8x128xf32>
    %156 = vector.extract_strided_slice %155 {offsets = [0, 0], sizes = [8, 32], strides = [1, 1]} : vector<8x128xf32> to vector<8x32xf32>
    %157 = arith.negf %156 : vector<8x32xf32>
    %158 = math.exp %157 : vector<8x32xf32>
    %cst_47 = arith.constant 1.000000e+00 : f32
    %159 = vector.broadcast %cst_47 : f32 to vector<8x32xf32>
    %160 = arith.addf %159, %158 : vector<8x32xf32>
    %161 = arith.divf %159, %160 : vector<8x32xf32>
    %162 = vector.extract_strided_slice %155 {offsets = [0, 32], sizes = [8, 32], strides = [1, 1]} : vector<8x128xf32> to vector<8x32xf32>
    %163 = arith.negf %162 : vector<8x32xf32>
    %164 = math.exp %163 : vector<8x32xf32>
    %cst_48 = arith.constant 1.000000e+00 : f32
    %165 = vector.broadcast %cst_48 : f32 to vector<8x32xf32>
    %166 = arith.addf %165, %164 : vector<8x32xf32>
    %167 = arith.divf %165, %166 : vector<8x32xf32>
    %168 = vector.extract_strided_slice %155 {offsets = [0, 64], sizes = [8, 32], strides = [1, 1]} : vector<8x128xf32> to vector<8x32xf32>
    %169 = math.tanh %168 : vector<8x32xf32>
    %170 = vector.extract_strided_slice %155 {offsets = [0, 96], sizes = [8, 32], strides = [1, 1]} : vector<8x128xf32> to vector<8x32xf32>
    %171 = arith.negf %170 : vector<8x32xf32>
    %172 = math.exp %171 : vector<8x32xf32>
    %cst_49 = arith.constant 1.000000e+00 : f32
    %173 = vector.broadcast %cst_49 : f32 to vector<8x32xf32>
    %174 = arith.addf %173, %172 : vector<8x32xf32>
    %175 = arith.divf %173, %174 : vector<8x32xf32>
    %176 = arith.mulf %167, %111 : vector<8x32xf32>
    %177 = arith.mulf %161, %169 : vector<8x32xf32>
    %178 = arith.addf %176, %177 : vector<8x32xf32>
    %179 = math.tanh %178 : vector<8x32xf32>
    %180 = arith.mulf %175, %179 : vector<8x32xf32>
    %181 = tpu.concatenate %180, %141 in 1 : vector<8x32xf32>, vector<8x16xf32> -> vector<8x48xf32>
    %cst_50 = arith.constant dense<0.000000e+00> : vector<8x64xf32>
    %182 = tpu.matmul %181, %8, %cst_50 {dimension_numbers = #tpu.dot_dimension_numbers<[1], [0], [0], [1], [0, 0, 1, 1], [], []>} : vector<8x48xf32>, vector<48x64xf32>, vector<8x64xf32> -> vector<8x64xf32>
    %183 = arith.addf %182, %11 : vector<8x64xf32>
    %184 = vector.extract_strided_slice %183 {offsets = [0, 0], sizes = [8, 16], strides = [1, 1]} : vector<8x64xf32> to vector<8x16xf32>
    %185 = arith.negf %184 : vector<8x16xf32>
    %186 = math.exp %185 : vector<8x16xf32>
    %cst_51 = arith.constant 1.000000e+00 : f32
    %187 = vector.broadcast %cst_51 : f32 to vector<8x16xf32>
    %188 = arith.addf %187, %186 : vector<8x16xf32>
    %189 = arith.divf %187, %188 : vector<8x16xf32>
    %190 = vector.extract_strided_slice %183 {offsets = [0, 16], sizes = [8, 16], strides = [1, 1]} : vector<8x64xf32> to vector<8x16xf32>
    %191 = arith.negf %190 : vector<8x16xf32>
    %192 = math.exp %191 : vector<8x16xf32>
    %cst_52 = arith.constant 1.000000e+00 : f32
    %193 = vector.broadcast %cst_52 : f32 to vector<8x16xf32>
    %194 = arith.addf %193, %192 : vector<8x16xf32>
    %195 = arith.divf %193, %194 : vector<8x16xf32>
    %196 = vector.extract_strided_slice %183 {offsets = [0, 32], sizes = [8, 16], strides = [1, 1]} : vector<8x64xf32> to vector<8x16xf32>
    %197 = math.tanh %196 : vector<8x16xf32>
    %198 = vector.extract_strided_slice %183 {offsets = [0, 48], sizes = [8, 16], strides = [1, 1]} : vector<8x64xf32> to vector<8x16xf32>
    %199 = arith.negf %198 : vector<8x16xf32>
    %200 = math.exp %199 : vector<8x16xf32>
    %cst_53 = arith.constant 1.000000e+00 : f32
    %201 = vector.broadcast %cst_53 : f32 to vector<8x16xf32>
    %202 = arith.addf %201, %200 : vector<8x16xf32>
    %203 = arith.divf %201, %202 : vector<8x16xf32>
    %204 = arith.mulf %195, %139 : vector<8x16xf32>
    %205 = arith.mulf %189, %197 : vector<8x16xf32>
    %206 = arith.addf %204, %205 : vector<8x16xf32>
    %207 = math.tanh %206 : vector<8x16xf32>
    %208 = arith.mulf %203, %207 : vector<8x16xf32>
    %209 = arith.index_cast %c2_i32 : i32 to index
    %c0_54 = arith.constant 0 : index
    %c0_55 = arith.constant 0 : index
    %210 = vector.load %arg6[%209, %c0_54, %c0_55] : memref<8x8x32xf32, #tpu.memory_space<vmem>>, vector<1x8x32xf32>
    %211 = vector.shape_cast %210 : vector<1x8x32xf32> to vector<8x32xf32>
    %212 = vector.shape_cast %180 : vector<8x32xf32> to vector<1x8x32xf32>
    tpu.vector_store %arg6[%209, %c0_54, %c0_55], %212 {strides = array<i32>} : memref<8x8x32xf32, #tpu.memory_space<vmem>>, vector<1x8x32xf32>,
    %213 = arith.index_cast %c2_i32 : i32 to index
    %c0_56 = arith.constant 0 : index
    %c0_57 = arith.constant 0 : index
    %214 = vector.load %arg7[%213, %c0_56, %c0_57] : memref<8x8x16xf32, #tpu.memory_space<vmem>>, vector<1x8x16xf32>
    %215 = vector.shape_cast %214 : vector<1x8x16xf32> to vector<8x16xf32>
    %216 = vector.shape_cast %208 : vector<8x16xf32> to vector<1x8x16xf32>
    tpu.vector_store %arg7[%213, %c0_56, %c0_57], %216 {strides = array<i32>} : memref<8x8x16xf32, #tpu.memory_space<vmem>>, vector<1x8x16xf32>,
    %c3_i32 = arith.constant 3 : i32
    %c8_i32_58 = arith.constant 8 : i32
    %217 = arith.muli %c3_i32, %c8_i32_58 : i32
    %218 = tpu.assume_multiple %217, 8 : i32
    %219 = arith.index_cast %218 : i32 to index
    %c0_59 = arith.constant 0 : index
    %220 = vector.load %arg8[%219, %c0_59] : memref<64x128xf32, #tpu.memory_space<vmem>>, vector<8x128xf32>
    %cst_60 = arith.constant dense<0.000000e+00> : vector<8x128xf32>
    %221 = tpu.matmul %180, %7, %cst_60 {dimension_numbers = #tpu.dot_dimension_numbers<[1], [0], [0], [1], [0, 0, 1, 1], [], []>} : vector<8x32xf32>, vector<32x128xf32>, vector<8x128xf32> -> vector<8x128xf32>
    %222 = arith.addf %220, %221 : vector<8x128xf32>
    %223 = vector.extract_strided_slice %222 {offsets = [0, 0], sizes = [8, 32], strides = [1, 1]} : vector<8x128xf32> to vector<8x32xf32>
    %224 = arith.negf %223 : vector<8x32xf32>
    %225 = math.exp %224 : vector<8x32xf32>
    %cst_61 = arith.constant 1.000000e+00 : f32
    %226 = vector.broadcast %cst_61 : f32 to vector<8x32xf32>
    %227 = arith.addf %226, %225 : vector<8x32xf32>
    %228 = arith.divf %226, %227 : vector<8x32xf32>
    %229 = vector.extract_strided_slice %222 {offsets = [0, 32], sizes = [8, 32], strides = [1, 1]} : vector<8x128xf32> to vector<8x32xf32>
    %230 = arith.negf %229 : vector<8x32xf32>
    %231 = math.exp %230 : vector<8x32xf32>
    %cst_62 = arith.constant 1.000000e+00 : f32
    %232 = vector.broadcast %cst_62 : f32 to vector<8x32xf32>
    %233 = arith.addf %232, %231 : vector<8x32xf32>
    %234 = arith.divf %232, %233 : vector<8x32xf32>
    %235 = vector.extract_strided_slice %222 {offsets = [0, 64], sizes = [8, 32], strides = [1, 1]} : vector<8x128xf32> to vector<8x32xf32>
    %236 = math.tanh %235 : vector<8x32xf32>
    %237 = vector.extract_strided_slice %222 {offsets = [0, 96], sizes = [8, 32], strides = [1, 1]} : vector<8x128xf32> to vector<8x32xf32>
    %238 = arith.negf %237 : vector<8x32xf32>
    %239 = math.exp %238 : vector<8x32xf32>
    %cst_63 = arith.constant 1.000000e+00 : f32
    %240 = vector.broadcast %cst_63 : f32 to vector<8x32xf32>
    %241 = arith.addf %240, %239 : vector<8x32xf32>
    %242 = arith.divf %240, %241 : vector<8x32xf32>
    %243 = arith.mulf %234, %178 : vector<8x32xf32>
    %244 = arith.mulf %228, %236 : vector<8x32xf32>
    %245 = arith.addf %243, %244 : vector<8x32xf32>
    %246 = math.tanh %245 : vector<8x32xf32>
    %247 = arith.mulf %242, %246 : vector<8x32xf32>
    %248 = tpu.concatenate %247, %208 in 1 : vector<8x32xf32>, vector<8x16xf32> -> vector<8x48xf32>
    %cst_64 = arith.constant dense<0.000000e+00> : vector<8x64xf32>
    %249 = tpu.matmul %248, %8, %cst_64 {dimension_numbers = #tpu.dot_dimension_numbers<[1], [0], [0], [1], [0, 0, 1, 1], [], []>} : vector<8x48xf32>, vector<48x64xf32>, vector<8x64xf32> -> vector<8x64xf32>
    %250 = arith.addf %249, %11 : vector<8x64xf32>
    %251 = vector.extract_strided_slice %250 {offsets = [0, 0], sizes = [8, 16], strides = [1, 1]} : vector<8x64xf32> to vector<8x16xf32>
    %252 = arith.negf %251 : vector<8x16xf32>
    %253 = math.exp %252 : vector<8x16xf32>
    %cst_65 = arith.constant 1.000000e+00 : f32
    %254 = vector.broadcast %cst_65 : f32 to vector<8x16xf32>
    %255 = arith.addf %254, %253 : vector<8x16xf32>
    %256 = arith.divf %254, %255 : vector<8x16xf32>
    %257 = vector.extract_strided_slice %250 {offsets = [0, 16], sizes = [8, 16], strides = [1, 1]} : vector<8x64xf32> to vector<8x16xf32>
    %258 = arith.negf %257 : vector<8x16xf32>
    %259 = math.exp %258 : vector<8x16xf32>
    %cst_66 = arith.constant 1.000000e+00 : f32
    %260 = vector.broadcast %cst_66 : f32 to vector<8x16xf32>
    %261 = arith.addf %260, %259 : vector<8x16xf32>
    %262 = arith.divf %260, %261 : vector<8x16xf32>
    %263 = vector.extract_strided_slice %250 {offsets = [0, 32], sizes = [8, 16], strides = [1, 1]} : vector<8x64xf32> to vector<8x16xf32>
    %264 = math.tanh %263 : vector<8x16xf32>
    %265 = vector.extract_strided_slice %250 {offsets = [0, 48], sizes = [8, 16], strides = [1, 1]} : vector<8x64xf32> to vector<8x16xf32>
    %266 = arith.negf %265 : vector<8x16xf32>
    %267 = math.exp %266 : vector<8x16xf32>
    %cst_67 = arith.constant 1.000000e+00 : f32
    %268 = vector.broadcast %cst_67 : f32 to vector<8x16xf32>
    %269 = arith.addf %268, %267 : vector<8x16xf32>
    %270 = arith.divf %268, %269 : vector<8x16xf32>
    %271 = arith.mulf %262, %206 : vector<8x16xf32>
    %272 = arith.mulf %256, %264 : vector<8x16xf32>
    %273 = arith.addf %271, %272 : vector<8x16xf32>
    %274 = math.tanh %273 : vector<8x16xf32>
    %275 = arith.mulf %270, %274 : vector<8x16xf32>
    %276 = arith.index_cast %c3_i32 : i32 to index
    %c0_68 = arith.constant 0 : index
    %c0_69 = arith.constant 0 : index
    %277 = vector.load %arg6[%276, %c0_68, %c0_69] : memref<8x8x32xf32, #tpu.memory_space<vmem>>, vector<1x8x32xf32>
    %278 = vector.shape_cast %277 : vector<1x8x32xf32> to vector<8x32xf32>
    %279 = vector.shape_cast %247 : vector<8x32xf32> to vector<1x8x32xf32>
    tpu.vector_store %arg6[%276, %c0_68, %c0_69], %279 {strides = array<i32>} : memref<8x8x32xf32, #tpu.memory_space<vmem>>, vector<1x8x32xf32>,
    %280 = arith.index_cast %c3_i32 : i32 to index
    %c0_70 = arith.constant 0 : index
    %c0_71 = arith.constant 0 : index
    %281 = vector.load %arg7[%280, %c0_70, %c0_71] : memref<8x8x16xf32, #tpu.memory_space<vmem>>, vector<1x8x16xf32>
    %282 = vector.shape_cast %281 : vector<1x8x16xf32> to vector<8x16xf32>
    %283 = vector.shape_cast %275 : vector<8x16xf32> to vector<1x8x16xf32>
    tpu.vector_store %arg7[%280, %c0_70, %c0_71], %283 {strides = array<i32>} : memref<8x8x16xf32, #tpu.memory_space<vmem>>, vector<1x8x16xf32>,
    %c4_i32 = arith.constant 4 : i32
    %c8_i32_72 = arith.constant 8 : i32
    %284 = arith.muli %c4_i32, %c8_i32_72 : i32
    %285 = tpu.assume_multiple %284, 8 : i32
    %286 = arith.index_cast %285 : i32 to index
    %c0_73 = arith.constant 0 : index
    %287 = vector.load %arg8[%286, %c0_73] : memref<64x128xf32, #tpu.memory_space<vmem>>, vector<8x128xf32>
    %cst_74 = arith.constant dense<0.000000e+00> : vector<8x128xf32>
    %288 = tpu.matmul %247, %7, %cst_74 {dimension_numbers = #tpu.dot_dimension_numbers<[1], [0], [0], [1], [0, 0, 1, 1], [], []>} : vector<8x32xf32>, vector<32x128xf32>, vector<8x128xf32> -> vector<8x128xf32>
    %289 = arith.addf %287, %288 : vector<8x128xf32>
    %290 = vector.extract_strided_slice %289 {offsets = [0, 0], sizes = [8, 32], strides = [1, 1]} : vector<8x128xf32> to vector<8x32xf32>
    %291 = arith.negf %290 : vector<8x32xf32>
    %292 = math.exp %291 : vector<8x32xf32>
    %cst_75 = arith.constant 1.000000e+00 : f32
    %293 = vector.broadcast %cst_75 : f32 to vector<8x32xf32>
    %294 = arith.addf %293, %292 : vector<8x32xf32>
    %295 = arith.divf %293, %294 : vector<8x32xf32>
    %296 = vector.extract_strided_slice %289 {offsets = [0, 32], sizes = [8, 32], strides = [1, 1]} : vector<8x128xf32> to vector<8x32xf32>
    %297 = arith.negf %296 : vector<8x32xf32>
    %298 = math.exp %297 : vector<8x32xf32>
    %cst_76 = arith.constant 1.000000e+00 : f32
    %299 = vector.broadcast %cst_76 : f32 to vector<8x32xf32>
    %300 = arith.addf %299, %298 : vector<8x32xf32>
    %301 = arith.divf %299, %300 : vector<8x32xf32>
    %302 = vector.extract_strided_slice %289 {offsets = [0, 64], sizes = [8, 32], strides = [1, 1]} : vector<8x128xf32> to vector<8x32xf32>
    %303 = math.tanh %302 : vector<8x32xf32>
    %304 = vector.extract_strided_slice %289 {offsets = [0, 96], sizes = [8, 32], strides = [1, 1]} : vector<8x128xf32> to vector<8x32xf32>
    %305 = arith.negf %304 : vector<8x32xf32>
    %306 = math.exp %305 : vector<8x32xf32>
    %cst_77 = arith.constant 1.000000e+00 : f32
    %307 = vector.broadcast %cst_77 : f32 to vector<8x32xf32>
    %308 = arith.addf %307, %306 : vector<8x32xf32>
    %309 = arith.divf %307, %308 : vector<8x32xf32>
    %310 = arith.mulf %301, %245 : vector<8x32xf32>
    %311 = arith.mulf %295, %303 : vector<8x32xf32>
    %312 = arith.addf %310, %311 : vector<8x32xf32>
    %313 = math.tanh %312 : vector<8x32xf32>
    %314 = arith.mulf %309, %313 : vector<8x32xf32>
    %315 = tpu.concatenate %314, %275 in 1 : vector<8x32xf32>, vector<8x16xf32> -> vector<8x48xf32>
    %cst_78 = arith.constant dense<0.000000e+00> : vector<8x64xf32>
    %316 = tpu.matmul %315, %8, %cst_78 {dimension_numbers = #tpu.dot_dimension_numbers<[1], [0], [0], [1], [0, 0, 1, 1], [], []>} : vector<8x48xf32>, vector<48x64xf32>, vector<8x64xf32> -> vector<8x64xf32>
    %317 = arith.addf %316, %11 : vector<8x64xf32>
    %318 = vector.extract_strided_slice %317 {offsets = [0, 0], sizes = [8, 16], strides = [1, 1]} : vector<8x64xf32> to vector<8x16xf32>
    %319 = arith.negf %318 : vector<8x16xf32>
    %320 = math.exp %319 : vector<8x16xf32>
    %cst_79 = arith.constant 1.000000e+00 : f32
    %321 = vector.broadcast %cst_79 : f32 to vector<8x16xf32>
    %322 = arith.addf %321, %320 : vector<8x16xf32>
    %323 = arith.divf %321, %322 : vector<8x16xf32>
    %324 = vector.extract_strided_slice %317 {offsets = [0, 16], sizes = [8, 16], strides = [1, 1]} : vector<8x64xf32> to vector<8x16xf32>
    %325 = arith.negf %324 : vector<8x16xf32>
    %326 = math.exp %325 : vector<8x16xf32>
    %cst_80 = arith.constant 1.000000e+00 : f32
    %327 = vector.broadcast %cst_80 : f32 to vector<8x16xf32>
    %328 = arith.addf %327, %326 : vector<8x16xf32>
    %329 = arith.divf %327, %328 : vector<8x16xf32>
    %330 = vector.extract_strided_slice %317 {offsets = [0, 32], sizes = [8, 16], strides = [1, 1]} : vector<8x64xf32> to vector<8x16xf32>
    %331 = math.tanh %330 : vector<8x16xf32>
    %332 = vector.extract_strided_slice %317 {offsets = [0, 48], sizes = [8, 16], strides = [1, 1]} : vector<8x64xf32> to vector<8x16xf32>
    %333 = arith.negf %332 : vector<8x16xf32>
    %334 = math.exp %333 : vector<8x16xf32>
    %cst_81 = arith.constant 1.000000e+00 : f32
    %335 = vector.broadcast %cst_81 : f32 to vector<8x16xf32>
    %336 = arith.addf %335, %334 : vector<8x16xf32>
    %337 = arith.divf %335, %336 : vector<8x16xf32>
    %338 = arith.mulf %329, %273 : vector<8x16xf32>
    %339 = arith.mulf %323, %331 : vector<8x16xf32>
    %340 = arith.addf %338, %339 : vector<8x16xf32>
    %341 = math.tanh %340 : vector<8x16xf32>
    %342 = arith.mulf %337, %341 : vector<8x16xf32>
    %343 = arith.index_cast %c4_i32 : i32 to index
    %c0_82 = arith.constant 0 : index
    %c0_83 = arith.constant 0 : index
    %344 = vector.load %arg6[%343, %c0_82, %c0_83] : memref<8x8x32xf32, #tpu.memory_space<vmem>>, vector<1x8x32xf32>
    %345 = vector.shape_cast %344 : vector<1x8x32xf32> to vector<8x32xf32>
    %346 = vector.shape_cast %314 : vector<8x32xf32> to vector<1x8x32xf32>
    tpu.vector_store %arg6[%343, %c0_82, %c0_83], %346 {strides = array<i32>} : memref<8x8x32xf32, #tpu.memory_space<vmem>>, vector<1x8x32xf32>,
    %347 = arith.index_cast %c4_i32 : i32 to index
    %c0_84 = arith.constant 0 : index
    %c0_85 = arith.constant 0 : index
    %348 = vector.load %arg7[%347, %c0_84, %c0_85] : memref<8x8x16xf32, #tpu.memory_space<vmem>>, vector<1x8x16xf32>
    %349 = vector.shape_cast %348 : vector<1x8x16xf32> to vector<8x16xf32>
    %350 = vector.shape_cast %342 : vector<8x16xf32> to vector<1x8x16xf32>
    tpu.vector_store %arg7[%347, %c0_84, %c0_85], %350 {strides = array<i32>} : memref<8x8x16xf32, #tpu.memory_space<vmem>>, vector<1x8x16xf32>,
    %c5_i32 = arith.constant 5 : i32
    %c8_i32_86 = arith.constant 8 : i32
    %351 = arith.muli %c5_i32, %c8_i32_86 : i32
    %352 = tpu.assume_multiple %351, 8 : i32
    %353 = arith.index_cast %352 : i32 to index
    %c0_87 = arith.constant 0 : index
    %354 = vector.load %arg8[%353, %c0_87] : memref<64x128xf32, #tpu.memory_space<vmem>>, vector<8x128xf32>
    %cst_88 = arith.constant dense<0.000000e+00> : vector<8x128xf32>
    %355 = tpu.matmul %314, %7, %cst_88 {dimension_numbers = #tpu.dot_dimension_numbers<[1], [0], [0], [1], [0, 0, 1, 1], [], []>} : vector<8x32xf32>, vector<32x128xf32>, vector<8x128xf32> -> vector<8x128xf32>
    %356 = arith.addf %354, %355 : vector<8x128xf32>
    %357 = vector.extract_strided_slice %356 {offsets = [0, 0], sizes = [8, 32], strides = [1, 1]} : vector<8x128xf32> to vector<8x32xf32>
    %358 = arith.negf %357 : vector<8x32xf32>
    %359 = math.exp %358 : vector<8x32xf32>
    %cst_89 = arith.constant 1.000000e+00 : f32
    %360 = vector.broadcast %cst_89 : f32 to vector<8x32xf32>
    %361 = arith.addf %360, %359 : vector<8x32xf32>
    %362 = arith.divf %360, %361 : vector<8x32xf32>
    %363 = vector.extract_strided_slice %356 {offsets = [0, 32], sizes = [8, 32], strides = [1, 1]} : vector<8x128xf32> to vector<8x32xf32>
    %364 = arith.negf %363 : vector<8x32xf32>
    %365 = math.exp %364 : vector<8x32xf32>
    %cst_90 = arith.constant 1.000000e+00 : f32
    %366 = vector.broadcast %cst_90 : f32 to vector<8x32xf32>
    %367 = arith.addf %366, %365 : vector<8x32xf32>
    %368 = arith.divf %366, %367 : vector<8x32xf32>
    %369 = vector.extract_strided_slice %356 {offsets = [0, 64], sizes = [8, 32], strides = [1, 1]} : vector<8x128xf32> to vector<8x32xf32>
    %370 = math.tanh %369 : vector<8x32xf32>
    %371 = vector.extract_strided_slice %356 {offsets = [0, 96], sizes = [8, 32], strides = [1, 1]} : vector<8x128xf32> to vector<8x32xf32>
    %372 = arith.negf %371 : vector<8x32xf32>
    %373 = math.exp %372 : vector<8x32xf32>
    %cst_91 = arith.constant 1.000000e+00 : f32
    %374 = vector.broadcast %cst_91 : f32 to vector<8x32xf32>
    %375 = arith.addf %374, %373 : vector<8x32xf32>
    %376 = arith.divf %374, %375 : vector<8x32xf32>
    %377 = arith.mulf %368, %312 : vector<8x32xf32>
    %378 = arith.mulf %362, %370 : vector<8x32xf32>
    %379 = arith.addf %377, %378 : vector<8x32xf32>
    %380 = math.tanh %379 : vector<8x32xf32>
    %381 = arith.mulf %376, %380 : vector<8x32xf32>
    %382 = tpu.concatenate %381, %342 in 1 : vector<8x32xf32>, vector<8x16xf32> -> vector<8x48xf32>
    %cst_92 = arith.constant dense<0.000000e+00> : vector<8x64xf32>
    %383 = tpu.matmul %382, %8, %cst_92 {dimension_numbers = #tpu.dot_dimension_numbers<[1], [0], [0], [1], [0, 0, 1, 1], [], []>} : vector<8x48xf32>, vector<48x64xf32>, vector<8x64xf32> -> vector<8x64xf32>
    %384 = arith.addf %383, %11 : vector<8x64xf32>
    %385 = vector.extract_strided_slice %384 {offsets = [0, 0], sizes = [8, 16], strides = [1, 1]} : vector<8x64xf32> to vector<8x16xf32>
    %386 = arith.negf %385 : vector<8x16xf32>
    %387 = math.exp %386 : vector<8x16xf32>
    %cst_93 = arith.constant 1.000000e+00 : f32
    %388 = vector.broadcast %cst_93 : f32 to vector<8x16xf32>
    %389 = arith.addf %388, %387 : vector<8x16xf32>
    %390 = arith.divf %388, %389 : vector<8x16xf32>
    %391 = vector.extract_strided_slice %384 {offsets = [0, 16], sizes = [8, 16], strides = [1, 1]} : vector<8x64xf32> to vector<8x16xf32>
    %392 = arith.negf %391 : vector<8x16xf32>
    %393 = math.exp %392 : vector<8x16xf32>
    %cst_94 = arith.constant 1.000000e+00 : f32
    %394 = vector.broadcast %cst_94 : f32 to vector<8x16xf32>
    %395 = arith.addf %394, %393 : vector<8x16xf32>
    %396 = arith.divf %394, %395 : vector<8x16xf32>
    %397 = vector.extract_strided_slice %384 {offsets = [0, 32], sizes = [8, 16], strides = [1, 1]} : vector<8x64xf32> to vector<8x16xf32>
    %398 = math.tanh %397 : vector<8x16xf32>
    %399 = vector.extract_strided_slice %384 {offsets = [0, 48], sizes = [8, 16], strides = [1, 1]} : vector<8x64xf32> to vector<8x16xf32>
    %400 = arith.negf %399 : vector<8x16xf32>
    %401 = math.exp %400 : vector<8x16xf32>
    %cst_95 = arith.constant 1.000000e+00 : f32
    %402 = vector.broadcast %cst_95 : f32 to vector<8x16xf32>
    %403 = arith.addf %402, %401 : vector<8x16xf32>
    %404 = arith.divf %402, %403 : vector<8x16xf32>
    %405 = arith.mulf %396, %340 : vector<8x16xf32>
    %406 = arith.mulf %390, %398 : vector<8x16xf32>
    %407 = arith.addf %405, %406 : vector<8x16xf32>
    %408 = math.tanh %407 : vector<8x16xf32>
    %409 = arith.mulf %404, %408 : vector<8x16xf32>
    %410 = arith.index_cast %c5_i32 : i32 to index
    %c0_96 = arith.constant 0 : index
    %c0_97 = arith.constant 0 : index
    %411 = vector.load %arg6[%410, %c0_96, %c0_97] : memref<8x8x32xf32, #tpu.memory_space<vmem>>, vector<1x8x32xf32>
    %412 = vector.shape_cast %411 : vector<1x8x32xf32> to vector<8x32xf32>
    %413 = vector.shape_cast %381 : vector<8x32xf32> to vector<1x8x32xf32>
    tpu.vector_store %arg6[%410, %c0_96, %c0_97], %413 {strides = array<i32>} : memref<8x8x32xf32, #tpu.memory_space<vmem>>, vector<1x8x32xf32>,
    %414 = arith.index_cast %c5_i32 : i32 to index
    %c0_98 = arith.constant 0 : index
    %c0_99 = arith.constant 0 : index
    %415 = vector.load %arg7[%414, %c0_98, %c0_99] : memref<8x8x16xf32, #tpu.memory_space<vmem>>, vector<1x8x16xf32>
    %416 = vector.shape_cast %415 : vector<1x8x16xf32> to vector<8x16xf32>
    %417 = vector.shape_cast %409 : vector<8x16xf32> to vector<1x8x16xf32>
    tpu.vector_store %arg7[%414, %c0_98, %c0_99], %417 {strides = array<i32>} : memref<8x8x16xf32, #tpu.memory_space<vmem>>, vector<1x8x16xf32>,
    %c6_i32 = arith.constant 6 : i32
    %c8_i32_100 = arith.constant 8 : i32
    %418 = arith.muli %c6_i32, %c8_i32_100 : i32
    %419 = tpu.assume_multiple %418, 8 : i32
    %420 = arith.index_cast %419 : i32 to index
    %c0_101 = arith.constant 0 : index
    %421 = vector.load %arg8[%420, %c0_101] : memref<64x128xf32, #tpu.memory_space<vmem>>, vector<8x128xf32>
    %cst_102 = arith.constant dense<0.000000e+00> : vector<8x128xf32>
    %422 = tpu.matmul %381, %7, %cst_102 {dimension_numbers = #tpu.dot_dimension_numbers<[1], [0], [0], [1], [0, 0, 1, 1], [], []>} : vector<8x32xf32>, vector<32x128xf32>, vector<8x128xf32> -> vector<8x128xf32>
    %423 = arith.addf %421, %422 : vector<8x128xf32>
    %424 = vector.extract_strided_slice %423 {offsets = [0, 0], sizes = [8, 32], strides = [1, 1]} : vector<8x128xf32> to vector<8x32xf32>
    %425 = arith.negf %424 : vector<8x32xf32>
    %426 = math.exp %425 : vector<8x32xf32>
    %cst_103 = arith.constant 1.000000e+00 : f32
    %427 = vector.broadcast %cst_103 : f32 to vector<8x32xf32>
    %428 = arith.addf %427, %426 : vector<8x32xf32>
    %429 = arith.divf %427, %428 : vector<8x32xf32>
    %430 = vector.extract_strided_slice %423 {offsets = [0, 32], sizes = [8, 32], strides = [1, 1]} : vector<8x128xf32> to vector<8x32xf32>
    %431 = arith.negf %430 : vector<8x32xf32>
    %432 = math.exp %431 : vector<8x32xf32>
    %cst_104 = arith.constant 1.000000e+00 : f32
    %433 = vector.broadcast %cst_104 : f32 to vector<8x32xf32>
    %434 = arith.addf %433, %432 : vector<8x32xf32>
    %435 = arith.divf %433, %434 : vector<8x32xf32>
    %436 = vector.extract_strided_slice %423 {offsets = [0, 64], sizes = [8, 32], strides = [1, 1]} : vector<8x128xf32> to vector<8x32xf32>
    %437 = math.tanh %436 : vector<8x32xf32>
    %438 = vector.extract_strided_slice %423 {offsets = [0, 96], sizes = [8, 32], strides = [1, 1]} : vector<8x128xf32> to vector<8x32xf32>
    %439 = arith.negf %438 : vector<8x32xf32>
    %440 = math.exp %439 : vector<8x32xf32>
    %cst_105 = arith.constant 1.000000e+00 : f32
    %441 = vector.broadcast %cst_105 : f32 to vector<8x32xf32>
    %442 = arith.addf %441, %440 : vector<8x32xf32>
    %443 = arith.divf %441, %442 : vector<8x32xf32>
    %444 = arith.mulf %435, %379 : vector<8x32xf32>
    %445 = arith.mulf %429, %437 : vector<8x32xf32>
    %446 = arith.addf %444, %445 : vector<8x32xf32>
    %447 = math.tanh %446 : vector<8x32xf32>
    %448 = arith.mulf %443, %447 : vector<8x32xf32>
    %449 = tpu.concatenate %448, %409 in 1 : vector<8x32xf32>, vector<8x16xf32> -> vector<8x48xf32>
    %cst_106 = arith.constant dense<0.000000e+00> : vector<8x64xf32>
    %450 = tpu.matmul %449, %8, %cst_106 {dimension_numbers = #tpu.dot_dimension_numbers<[1], [0], [0], [1], [0, 0, 1, 1], [], []>} : vector<8x48xf32>, vector<48x64xf32>, vector<8x64xf32> -> vector<8x64xf32>
    %451 = arith.addf %450, %11 : vector<8x64xf32>
    %452 = vector.extract_strided_slice %451 {offsets = [0, 0], sizes = [8, 16], strides = [1, 1]} : vector<8x64xf32> to vector<8x16xf32>
    %453 = arith.negf %452 : vector<8x16xf32>
    %454 = math.exp %453 : vector<8x16xf32>
    %cst_107 = arith.constant 1.000000e+00 : f32
    %455 = vector.broadcast %cst_107 : f32 to vector<8x16xf32>
    %456 = arith.addf %455, %454 : vector<8x16xf32>
    %457 = arith.divf %455, %456 : vector<8x16xf32>
    %458 = vector.extract_strided_slice %451 {offsets = [0, 16], sizes = [8, 16], strides = [1, 1]} : vector<8x64xf32> to vector<8x16xf32>
    %459 = arith.negf %458 : vector<8x16xf32>
    %460 = math.exp %459 : vector<8x16xf32>
    %cst_108 = arith.constant 1.000000e+00 : f32
    %461 = vector.broadcast %cst_108 : f32 to vector<8x16xf32>
    %462 = arith.addf %461, %460 : vector<8x16xf32>
    %463 = arith.divf %461, %462 : vector<8x16xf32>
    %464 = vector.extract_strided_slice %451 {offsets = [0, 32], sizes = [8, 16], strides = [1, 1]} : vector<8x64xf32> to vector<8x16xf32>
    %465 = math.tanh %464 : vector<8x16xf32>
    %466 = vector.extract_strided_slice %451 {offsets = [0, 48], sizes = [8, 16], strides = [1, 1]} : vector<8x64xf32> to vector<8x16xf32>
    %467 = arith.negf %466 : vector<8x16xf32>
    %468 = math.exp %467 : vector<8x16xf32>
    %cst_109 = arith.constant 1.000000e+00 : f32
    %469 = vector.broadcast %cst_109 : f32 to vector<8x16xf32>
    %470 = arith.addf %469, %468 : vector<8x16xf32>
    %471 = arith.divf %469, %470 : vector<8x16xf32>
    %472 = arith.mulf %463, %407 : vector<8x16xf32>
    %473 = arith.mulf %457, %465 : vector<8x16xf32>
    %474 = arith.addf %472, %473 : vector<8x16xf32>
    %475 = math.tanh %474 : vector<8x16xf32>
    %476 = arith.mulf %471, %475 : vector<8x16xf32>
    %477 = arith.index_cast %c6_i32 : i32 to index
    %c0_110 = arith.constant 0 : index
    %c0_111 = arith.constant 0 : index
    %478 = vector.load %arg6[%477, %c0_110, %c0_111] : memref<8x8x32xf32, #tpu.memory_space<vmem>>, vector<1x8x32xf32>
    %479 = vector.shape_cast %478 : vector<1x8x32xf32> to vector<8x32xf32>
    %480 = vector.shape_cast %448 : vector<8x32xf32> to vector<1x8x32xf32>
    tpu.vector_store %arg6[%477, %c0_110, %c0_111], %480 {strides = array<i32>} : memref<8x8x32xf32, #tpu.memory_space<vmem>>, vector<1x8x32xf32>,
    %481 = arith.index_cast %c6_i32 : i32 to index
    %c0_112 = arith.constant 0 : index
    %c0_113 = arith.constant 0 : index
    %482 = vector.load %arg7[%481, %c0_112, %c0_113] : memref<8x8x16xf32, #tpu.memory_space<vmem>>, vector<1x8x16xf32>
    %483 = vector.shape_cast %482 : vector<1x8x16xf32> to vector<8x16xf32>
    %484 = vector.shape_cast %476 : vector<8x16xf32> to vector<1x8x16xf32>
    tpu.vector_store %arg7[%481, %c0_112, %c0_113], %484 {strides = array<i32>} : memref<8x8x16xf32, #tpu.memory_space<vmem>>, vector<1x8x16xf32>,
    %c7_i32 = arith.constant 7 : i32
    %c8_i32_114 = arith.constant 8 : i32
    %485 = arith.muli %c7_i32, %c8_i32_114 : i32
    %486 = tpu.assume_multiple %485, 8 : i32
    %487 = arith.index_cast %486 : i32 to index
    %c0_115 = arith.constant 0 : index
    %488 = vector.load %arg8[%487, %c0_115] : memref<64x128xf32, #tpu.memory_space<vmem>>, vector<8x128xf32>
    %cst_116 = arith.constant dense<0.000000e+00> : vector<8x128xf32>
    %489 = tpu.matmul %448, %7, %cst_116 {dimension_numbers = #tpu.dot_dimension_numbers<[1], [0], [0], [1], [0, 0, 1, 1], [], []>} : vector<8x32xf32>, vector<32x128xf32>, vector<8x128xf32> -> vector<8x128xf32>
    %490 = arith.addf %488, %489 : vector<8x128xf32>
    %491 = vector.extract_strided_slice %490 {offsets = [0, 0], sizes = [8, 32], strides = [1, 1]} : vector<8x128xf32> to vector<8x32xf32>
    %492 = arith.negf %491 : vector<8x32xf32>
    %493 = math.exp %492 : vector<8x32xf32>
    %cst_117 = arith.constant 1.000000e+00 : f32
    %494 = vector.broadcast %cst_117 : f32 to vector<8x32xf32>
    %495 = arith.addf %494, %493 : vector<8x32xf32>
    %496 = arith.divf %494, %495 : vector<8x32xf32>
    %497 = vector.extract_strided_slice %490 {offsets = [0, 32], sizes = [8, 32], strides = [1, 1]} : vector<8x128xf32> to vector<8x32xf32>
    %498 = arith.negf %497 : vector<8x32xf32>
    %499 = math.exp %498 : vector<8x32xf32>
    %cst_118 = arith.constant 1.000000e+00 : f32
    %500 = vector.broadcast %cst_118 : f32 to vector<8x32xf32>
    %501 = arith.addf %500, %499 : vector<8x32xf32>
    %502 = arith.divf %500, %501 : vector<8x32xf32>
    %503 = vector.extract_strided_slice %490 {offsets = [0, 64], sizes = [8, 32], strides = [1, 1]} : vector<8x128xf32> to vector<8x32xf32>
    %504 = math.tanh %503 : vector<8x32xf32>
    %505 = vector.extract_strided_slice %490 {offsets = [0, 96], sizes = [8, 32], strides = [1, 1]} : vector<8x128xf32> to vector<8x32xf32>
    %506 = arith.negf %505 : vector<8x32xf32>
    %507 = math.exp %506 : vector<8x32xf32>
    %cst_119 = arith.constant 1.000000e+00 : f32
    %508 = vector.broadcast %cst_119 : f32 to vector<8x32xf32>
    %509 = arith.addf %508, %507 : vector<8x32xf32>
    %510 = arith.divf %508, %509 : vector<8x32xf32>
    %511 = arith.mulf %502, %446 : vector<8x32xf32>
    %512 = arith.mulf %496, %504 : vector<8x32xf32>
    %513 = arith.addf %511, %512 : vector<8x32xf32>
    %514 = math.tanh %513 : vector<8x32xf32>
    %515 = arith.mulf %510, %514 : vector<8x32xf32>
    %516 = tpu.concatenate %515, %476 in 1 : vector<8x32xf32>, vector<8x16xf32> -> vector<8x48xf32>
    %cst_120 = arith.constant dense<0.000000e+00> : vector<8x64xf32>
    %517 = tpu.matmul %516, %8, %cst_120 {dimension_numbers = #tpu.dot_dimension_numbers<[1], [0], [0], [1], [0, 0, 1, 1], [], []>} : vector<8x48xf32>, vector<48x64xf32>, vector<8x64xf32> -> vector<8x64xf32>
    %518 = arith.addf %517, %11 : vector<8x64xf32>
    %519 = vector.extract_strided_slice %518 {offsets = [0, 0], sizes = [8, 16], strides = [1, 1]} : vector<8x64xf32> to vector<8x16xf32>
    %520 = arith.negf %519 : vector<8x16xf32>
    %521 = math.exp %520 : vector<8x16xf32>
    %cst_121 = arith.constant 1.000000e+00 : f32
    %522 = vector.broadcast %cst_121 : f32 to vector<8x16xf32>
    %523 = arith.addf %522, %521 : vector<8x16xf32>
    %524 = arith.divf %522, %523 : vector<8x16xf32>
    %525 = vector.extract_strided_slice %518 {offsets = [0, 16], sizes = [8, 16], strides = [1, 1]} : vector<8x64xf32> to vector<8x16xf32>
    %526 = arith.negf %525 : vector<8x16xf32>
    %527 = math.exp %526 : vector<8x16xf32>
    %cst_122 = arith.constant 1.000000e+00 : f32
    %528 = vector.broadcast %cst_122 : f32 to vector<8x16xf32>
    %529 = arith.addf %528, %527 : vector<8x16xf32>
    %530 = arith.divf %528, %529 : vector<8x16xf32>
    %531 = vector.extract_strided_slice %518 {offsets = [0, 32], sizes = [8, 16], strides = [1, 1]} : vector<8x64xf32> to vector<8x16xf32>
    %532 = math.tanh %531 : vector<8x16xf32>
    %533 = vector.extract_strided_slice %518 {offsets = [0, 48], sizes = [8, 16], strides = [1, 1]} : vector<8x64xf32> to vector<8x16xf32>
    %534 = arith.negf %533 : vector<8x16xf32>
    %535 = math.exp %534 : vector<8x16xf32>
    %cst_123 = arith.constant 1.000000e+00 : f32
    %536 = vector.broadcast %cst_123 : f32 to vector<8x16xf32>
    %537 = arith.addf %536, %535 : vector<8x16xf32>
    %538 = arith.divf %536, %537 : vector<8x16xf32>
    %539 = arith.mulf %530, %474 : vector<8x16xf32>
    %540 = arith.mulf %524, %532 : vector<8x16xf32>
    %541 = arith.addf %539, %540 : vector<8x16xf32>
    %542 = math.tanh %541 : vector<8x16xf32>
    %543 = arith.mulf %538, %542 : vector<8x16xf32>
    %544 = arith.index_cast %c7_i32 : i32 to index
    %c0_124 = arith.constant 0 : index
    %c0_125 = arith.constant 0 : index
    %545 = vector.load %arg6[%544, %c0_124, %c0_125] : memref<8x8x32xf32, #tpu.memory_space<vmem>>, vector<1x8x32xf32>
    %546 = vector.shape_cast %545 : vector<1x8x32xf32> to vector<8x32xf32>
    %547 = vector.shape_cast %515 : vector<8x32xf32> to vector<1x8x32xf32>
    tpu.vector_store %arg6[%544, %c0_124, %c0_125], %547 {strides = array<i32>} : memref<8x8x32xf32, #tpu.memory_space<vmem>>, vector<1x8x32xf32>,
    %548 = arith.index_cast %c7_i32 : i32 to index
    %c0_126 = arith.constant 0 : index
    %c0_127 = arith.constant 0 : index
    %549 = vector.load %arg7[%548, %c0_126, %c0_127] : memref<8x8x16xf32, #tpu.memory_space<vmem>>, vector<1x8x16xf32>
    %550 = vector.shape_cast %549 : vector<1x8x16xf32> to vector<8x16xf32>
    %551 = vector.shape_cast %543 : vector<8x16xf32> to vector<1x8x16xf32>
    tpu.vector_store %arg7[%548, %c0_126, %c0_127], %551 {strides = array<i32>} : memref<8x8x16xf32, #tpu.memory_space<vmem>>, vector<1x8x16xf32>,
    %c8_i32_128 = arith.constant 8 : i32
    return
  }
}

</mosaic_0001>

<llo_original>
// kernel: contractive_lstm_autoencoder.1
$region0: #{contractive_lstm_autoencoder.1}
  #allocation0 [shape = 'u32[]', space=smem, size = 0x4, offset = 0x4, fixed_abs, tag = 'smem constant byte address 0x4 - core index']
  #allocation1 [shape = 'u32[144,128]{1,0:T(1,128)}', space=vmem, size = 0x12000, scoped, tag = 'internal scratch']
  #allocation2 [shape = 'f32[64,128]{1,0:T(8,128)}', space=vmem, size = 0x8000, scoped, tag = 'scratch operand']
  %s0 = inlined_call_operand.hbm [shape: f32[64,16], index: 0, kind: input, shape index: {}]
  %s1 = inlined_call_operand.hbm [shape: f32[16,128], index: 1, kind: input, shape index: {}]
  %s2 = inlined_call_operand.hbm [shape: f32[1,128], index: 2, kind: input, shape index: {}]
  %s3 = inlined_call_operand.hbm [shape: f32[32,128], index: 3, kind: input, shape index: {}]
  %s4 = inlined_call_operand.hbm [shape: f32[48,64], index: 4, kind: input, shape index: {}]
  %s5 = inlined_call_operand.hbm [shape: f32[1,64], index: 5, kind: input, shape index: {}]
  %s6 = inlined_call_operand.hbm [shape: f32[8,8,32], index: 6, kind: output, shape index: {0}]
  %s7 = inlined_call_operand.hbm [shape: f32[8,8,16], index: 7, kind: output, shape index: {1}]
  %8 = xla_tuple %s6, %s7
  %s9 = sld [smem:[#allocation0]]
  $region66: #{contractive_lstm_autoencoder.1} parent=0
    _
  %s11 = ssub.s32 1, %s9
  %s12 = scalar_select 0, %s11, %s9
  $region1: #{contractive_lstm_autoencoder.1} parent=0
    #allocation3 [shape = 'u8[32768]{0}', space=vmem, size = 0x8000, scoped, tag = 'input window, operand 0, single buffered']
    #allocation4 [shape = 's32[1]{0}', space=sflag, size = 0x4, scoped, tag = 'scoped memory for contractive_lstm_autoencoder.1']
    #allocation5 [shape = 's32[1]{0}', space=sflag, size = 0x4, scoped, tag = 'scoped memory for contractive_lstm_autoencoder.1']
    #allocation6 [shape = 'u8[8192]{0}', space=vmem, size = 0x2000, scoped, tag = 'input window, operand 1, single buffered']
    #allocation7 [shape = 's32[1]{0}', space=sflag, size = 0x4, scoped, tag = 'scoped memory for contractive_lstm_autoencoder.1']
    #allocation8 [shape = 'u8[512]{0}', space=vmem, size = 0x400, scoped, tag = 'input window, operand 2, single buffered']
    #allocation9 [shape = 'u8[16384]{0}', space=vmem, size = 0x4000, scoped, tag = 'input window, operand 3, single buffered']
    #allocation10 [shape = 's32[1]{0}', space=sflag, size = 0x4, scoped, tag = 'scoped memory for contractive_lstm_autoencoder.1']
    #allocation11 [shape = 'u8[24576]{0}', space=vmem, size = 0x6000, scoped, tag = 'input window, operand 4, single buffered']
    #allocation12 [shape = 'u8[512]{0}', space=vmem, size = 0x400, scoped, tag = 'input window, operand 5, single buffered']
    #allocation13 [shape = 's32[1]{0}', space=sflag, size = 0x4, scoped, tag = 'scoped memory for contractive_lstm_autoencoder.1']
    #allocation14 [shape = 'u8[32768]{0}', space=vmem, size = 0x8000, scoped, tag = 'output window, operand 0, single buffered']
    #allocation15 [shape = 'u8[32768]{0}', space=vmem, size = 0x8000, scoped, tag = 'output window, operand 1, single buffered']
    #allocation16 [shape = 's32[1]{0}', space=sflag, size = 0x4, scoped, tag = 'scoped memory for contractive_lstm_autoencoder.1']
    %13 = vsyncpa [#allocation4], 0
    %14 = vsyncpa [#allocation7], 0
    %15 = vsyncpa [#allocation10], 0
    %16 = vsyncpa [#allocation13], 0
    %17 = vsyncpa [#allocation5], 0
    %18 = vsyncpa [#allocation16], 0
    // Predicated region
    $region2: #{contractive_lstm_autoencoder.1} parent=1 // pred_check
      _
    $region3: #{contractive_lstm_autoencoder.1} parent=1 // pred_check_branch
      %20 = sbr.rel (0) target = $region5
    $region4: #{contractive_lstm_autoencoder.1} parent=1 // pred_region
      %s22 = ssub.s32 1024, 1024
      %23 = vsyncadd [#allocation4], %s22
      %s24 = sshll.u32 [#allocation3], 4
      %s25 = int_to_ptr.vmem [resolvable:$true] %s24
      %30 = dma.hbm_to_vmem [thread:$0]  %s0, 1024, %s25, [#allocation4], 128, 128, 8
    $region5: #{contractive_lstm_autoencoder.1} parent=1 // pred_fallthru
      _
    // Predicated region
    $region6: #{contractive_lstm_autoencoder.1} parent=1 // pred_check
      _
    $region7: #{contractive_lstm_autoencoder.1} parent=1 // pred_check_branch
      %32 = sbr.rel (0) target = $region9
    $region8: #{contractive_lstm_autoencoder.1} parent=1 // pred_region
      %s34 = ssub.s32 256, 256
      %35 = vsyncadd [#allocation7], %s34
      %s36 = sshll.u32 [#allocation6], 4
      %s37 = int_to_ptr.vmem [resolvable:$true] %s36
      %42 = dma.hbm_to_vmem [thread:$0]  %s1, 256, %s37, [#allocation7], 128, 128, 8
    $region9: #{contractive_lstm_autoencoder.1} parent=1 // pred_fallthru
      _
    // Predicated region
    $region10: #{contractive_lstm_autoencoder.1} parent=1 // pred_check
      _
    $region11: #{contractive_lstm_autoencoder.1} parent=1 // pred_check_branch
      %44 = sbr.rel (0) target = $region13
    $region12: #{contractive_lstm_autoencoder.1} parent=1 // pred_region
      %s46 = ssub.s32 16, 16
      %47 = vsyncadd [#allocation7], %s46
      %s49 = sshll.u32 [#allocation8], 4
      %s50 = int_to_ptr.vmem [resolvable:$true] %s49
      %52 = dma.hbm_to_vmem [thread:$0]  %s2, 16, %s50, [#allocation7]
    $region13: #{contractive_lstm_autoencoder.1} parent=1 // pred_fallthru
      _
    // Predicated region
    $region14: #{contractive_lstm_autoencoder.1} parent=1 // pred_check
      _
    $region15: #{contractive_lstm_autoencoder.1} parent=1 // pred_check_branch
      %54 = sbr.rel (0) target = $region17
    $region16: #{contractive_lstm_autoencoder.1} parent=1 // pred_region
      %s56 = ssub.s32 512, 512
      %57 = vsyncadd [#allocation10], %s56
      %s58 = sshll.u32 [#allocation9], 4
      %s59 = int_to_ptr.vmem [resolvable:$true] %s58
      %64 = dma.hbm_to_vmem [thread:$0]  %s3, 512, %s59, [#allocation10], 128, 128, 8
    $region17: #{contractive_lstm_autoencoder.1} parent=1 // pred_fallthru
      _
    // Predicated region
    $region18: #{contractive_lstm_autoencoder.1} parent=1 // pred_check
      _
    $region19: #{contractive_lstm_autoencoder.1} parent=1 // pred_check_branch
      %66 = sbr.rel (0) target = $region21
    $region20: #{contractive_lstm_autoencoder.1} parent=1 // pred_region
      %s68 = ssub.s32 768, 768
      %69 = vsyncadd [#allocation10], %s68
      %s70 = sshll.u32 [#allocation11], 4
      %s71 = int_to_ptr.vmem [resolvable:$true] %s70
      %76 = dma.hbm_to_vmem [thread:$0]  %s4, 768, %s71, [#allocation10], 128, 128, 8
    $region21: #{contractive_lstm_autoencoder.1} parent=1 // pred_fallthru
      _
    // Predicated region
    $region22: #{contractive_lstm_autoencoder.1} parent=1 // pred_check
      _
    $region23: #{contractive_lstm_autoencoder.1} parent=1 // pred_check_branch
      %78 = sbr.rel (0) target = $region25
    $region24: #{contractive_lstm_autoencoder.1} parent=1 // pred_region
      %s80 = ssub.s32 16, 16
      %81 = vsyncadd [#allocation13], %s80
      %s83 = sshll.u32 [#allocation12], 4
      %s84 = int_to_ptr.vmem [resolvable:$true] %s83
      %86 = dma.hbm_to_vmem [thread:$0]  %s5, 16, %s84, [#allocation13]
    $region25: #{contractive_lstm_autoencoder.1} parent=1 // pred_fallthru
      _
    // Predicated region
    $region26: #{contractive_lstm_autoencoder.1} parent=1 // pred_check
      _
    $region27: #{contractive_lstm_autoencoder.1} parent=1 // pred_check_branch
      %88 = sbr.rel (0) target = $region29
    $region28: #{contractive_lstm_autoencoder.1} parent=1 // pred_region
      %89 = dma.done [#allocation4], 1024
    $region29: #{contractive_lstm_autoencoder.1} parent=1 // pred_fallthru
      _
    // Predicated region
    $region30: #{contractive_lstm_autoencoder.1} parent=1 // pred_check
      _
    $region31: #{contractive_lstm_autoencoder.1} parent=1 // pred_check_branch
      %91 = sbr.rel (0) target = $region33
    $region32: #{contractive_lstm_autoencoder.1} parent=1 // pred_region
      %92 = dma.done [#allocation7], 256
    $region33: #{contractive_lstm_autoencoder.1} parent=1 // pred_fallthru
      _
    // Predicated region
    $region34: #{contractive_lstm_autoencoder.1} parent=1 // pred_check
      _
    $region35: #{contractive_lstm_autoencoder.1} parent=1 // pred_check_branch
      %94 = sbr.rel (0) target = $region37
    $region36: #{contractive_lstm_autoencoder.1} parent=1 // pred_region
      %95 = dma.done [#allocation7], 16
    $region37: #{contractive_lstm_autoencoder.1} parent=1 // pred_fallthru
      _
    // Predicated region
    $region38: #{contractive_lstm_autoencoder.1} parent=1 // pred_check
      _
    $region39: #{contractive_lstm_autoencoder.1} parent=1 // pred_check_branch
      %97 = sbr.rel (0) target = $region41
    $region40: #{contractive_lstm_autoencoder.1} parent=1 // pred_region
      %98 = dma.done [#allocation10], 512
    $region41: #{contractive_lstm_autoencoder.1} parent=1 // pred_fallthru
      _
    // Predicated region
    $region42: #{contractive_lstm_autoencoder.1} parent=1 // pred_check
      _
    $region43: #{contractive_lstm_autoencoder.1} parent=1 // pred_check_branch
      %100 = sbr.rel (0) target = $region45
    $region44: #{contractive_lstm_autoencoder.1} parent=1 // pred_region
      %101 = dma.done [#allocation10], 768
    $region45: #{contractive_lstm_autoencoder.1} parent=1 // pred_fallthru
      _
    // Predicated region
    $region46: #{contractive_lstm_autoencoder.1} parent=1 // pred_check
      _
    $region47: #{contractive_lstm_autoencoder.1} parent=1 // pred_check_branch
      %103 = sbr.rel (0) target = $region49
    $region48: #{contractive_lstm_autoencoder.1} parent=1 // pred_region
      %104 = dma.done [#allocation13], 16
    $region49: #{contractive_lstm_autoencoder.1} parent=1 // pred_fallthru
      _
    %v105 = vld [vmem:[#allocation3] sm:$0xff]
    %v106 = vld [vmem:[#allocation3 + $0x8] sm:$0xff]
    %v107 = vld [vmem:[#allocation3 + $0x10] sm:$0xff]
    %v108 = vld [vmem:[#allocation3 + $0x18] sm:$0xff]
    %v109 = vld [vmem:[#allocation3 + $0x20] sm:$0xff]
    %v110 = vld [vmem:[#allocation3 + $0x28] sm:$0xff]
    %v111 = vld [vmem:[#allocation3 + $0x30] sm:$0xff]
    %v112 = vld [vmem:[#allocation3 + $0x38] sm:$0xff]
    %v113 = vld [vmem:[#allocation6] sm:$0xff]
    %v114 = vld [vmem:[#allocation6 + $0x8] sm:$0xff]
    %v115 = vld [vmem:[#allocation8] sm:$0x1]
    %v117 = vlaneseq
    %v118 = vshrl.u32 %v117, 7
    %v119 = vsub.s32 0, %v118
    %v120 = vrot.slane %v115, %v119
    %vm122 = vcmask 130048
    %v124 = vsel %vm122, %v105, 0
    %v127 = vsel %vm122, %v106, 0
    %v130 = vsel %vm122, %v107, 0
    %v133 = vsel %vm122, %v108, 0
    %v136 = vsel %vm122, %v109, 0
    %v139 = vsel %vm122, %v110, 0
    %v142 = vsel %vm122, %v111, 0
    %v145 = vsel %vm122, %v112, 0
    %147 = vmatprep.subr.mxu0 0.0
    %148 = vmatpush1.msra.mxu0 %v113
    %149 = vmatprep.subr.mxu0 0.0
    %150 = vmatpush1.msra.mxu0 %v114
    %151 = vmatprep.subr.mxu0 0.0
    %152 = vmatpush1.msra.mxu0 0.0
    %153 = vmatprep.subr.mxu0 0.0
    %154 = vmatpush1.msra.mxu0 0.0
    %155 = vmatprep.subr.mxu0 0.0
    %156 = vmatpush1.msra.mxu0 0.0
    %157 = vmatprep.subr.mxu0 0.0
    %158 = vmatpush1.msra.mxu0 0.0
    %159 = vmatprep.subr.mxu0 0.0
    %160 = vmatpush1.msra.mxu0 0.0
    %161 = vmatprep.subr.mxu0 0.0
    %162 = vmatpush1.msra.mxu0 0.0
    %163 = vmatprep.subr.mxu0 0.0
    %164 = vmatpush1.msra.mxu0 0.0
    %165 = vmatprep.subr.mxu0 0.0
    %166 = vmatpush1.msra.mxu0 0.0
    %167 = vmatprep.subr.mxu0 0.0
    %168 = vmatpush1.msra.mxu0 0.0
    %169 = vmatprep.subr.mxu0 0.0
    %170 = vmatpush1.msra.mxu0 0.0
    %171 = vmatprep.subr.mxu0 0.0
    %172 = vmatpush1.msra.mxu0 0.0
    %173 = vmatprep.subr.mxu0 0.0
    %174 = vmatpush1.msra.mxu0 0.0
    %175 = vmatprep.subr.mxu0 0.0
    %176 = vmatpush1.msra.mxu0 0.0
    %177 = vmatprep.subr.mxu0 0.0
    %178 = vmatpush1.msra.mxu0 0.0
    %179 = vmatprep.subr.mxu0 0.0
    %180 = vmatpush1.msra.mxu0 0.0
    %181 = vmatprep.subr.mxu0 0.0
    %182 = vmatpush1.msra.mxu0 0.0
    %183 = vmatprep.subr.mxu0 0.0
    %184 = vmatpush1.msra.mxu0 0.0
    %185 = vmatprep.subr.mxu0 0.0
    %186 = vmatpush1.msra.mxu0 0.0
    %187 = vmatprep.subr.mxu0 0.0
    %188 = vmatpush1.msra.mxu0 0.0
    %189 = vmatprep.subr.mxu0 0.0
    %190 = vmatpush1.msra.mxu0 0.0
    %191 = vmatprep.subr.mxu0 0.0
    %192 = vmatpush1.msra.mxu0 0.0
    %193 = vmatprep.subr.mxu0 0.0
    %194 = vmatpush1.msra.mxu0 0.0
    %195 = vmatprep.subr.mxu0 0.0
    %196 = vmatpush1.msra.mxu0 0.0
    %197 = vmatprep.subr.mxu0 0.0
    %198 = vmatpush1.msra.mxu0 0.0
    %199 = vmatprep.subr.mxu0 0.0
    %200 = vmatpush1.msra.mxu0 0.0
    %201 = vmatprep.subr.mxu0 0.0
    %202 = vmatpush1.msra.mxu0 0.0
    %203 = vmatprep.subr.mxu0 0.0
    %204 = vmatpush1.msra.mxu0 0.0
    %205 = vmatprep.subr.mxu0 0.0
    %206 = vmatpush1.msra.mxu0 0.0
    %207 = vmatprep.subr.mxu0 0.0
    %208 = vmatpush1.msra.mxu0 0.0
    %209 = vmatprep.subr.mxu0 0.0
    %210 = vmatpush1.msra.mxu0 0.0
    %211 = vmatprep.mubr.f32.mxu0 0.0
    %212 = vmatmul.mubr.f32.gmra.mrb[0].mxu0 %v124
    %v213 = vpop.f32.mrb[0].mxu0
    %v214 = vadd.f32 %v120, %v213
    %v215 = vpop.f32.mrb[0].mxu0
    %216 = vmatprep.mubr.f32.mxu0 0.0
    %217 = vmatmul.mubr.f32.gmra.mrb[0].mxu0 %v127
    %v218 = vpop.f32.mrb[0].mxu0
    %v219 = vadd.f32 %v120, %v218
    %v220 = vpop.f32.mrb[0].mxu0
    %221 = vmatprep.mubr.f32.mxu0 0.0
    %222 = vmatmul.mubr.f32.gmra.mrb[0].mxu0 %v130
    %v223 = vpop.f32.mrb[0].mxu0
    %v224 = vadd.f32 %v120, %v223
    %v225 = vpop.f32.mrb[0].mxu0
    %226 = vmatprep.mubr.f32.mxu0 0.0
    %227 = vmatmul.mubr.f32.gmra.mrb[0].mxu0 %v133
    %v228 = vpop.f32.mrb[0].mxu0
    %v229 = vadd.f32 %v120, %v228
    %v230 = vpop.f32.mrb[0].mxu0
    %231 = vmatprep.mubr.f32.mxu0 0.0
    %232 = vmatmul.mubr.f32.gmra.mrb[0].mxu0 %v136
    %v233 = vpop.f32.mrb[0].mxu0
    %v234 = vadd.f32 %v120, %v233
    %v235 = vpop.f32.mrb[0].mxu0
    %236 = vmatprep.mubr.f32.mxu0 0.0
    %237 = vmatmul.mubr.f32.gmra.mrb[0].mxu0 %v139
    %v238 = vpop.f32.mrb[0].mxu0
    %v239 = vadd.f32 %v120, %v238
    %v240 = vpop.f32.mrb[0].mxu0
    %241 = vmatprep.mubr.f32.mxu0 0.0
    %242 = vmatmul.mubr.f32.gmra.mrb[0].mxu0 %v142
    %v243 = vpop.f32.mrb[0].mxu0
    %v244 = vadd.f32 %v120, %v243
    %v245 = vpop.f32.mrb[0].mxu0
    %246 = vmatprep.mubr.f32.mxu0 0.0
    %247 = vmatmul.mubr.f32.gmra.mrb[0].mxu0 %v145
    %v248 = vpop.f32.mrb[0].mxu0
    %v249 = vadd.f32 %v120, %v248
    %v250 = vpop.f32.mrb[0].mxu0
    %251 = vdwg.mxu0
    %252 = vst [vmem:[#allocation2] sm:$0xff] %v214
    %253 = vst [vmem:[#allocation2 + $0x8] sm:$0xff] %v219
    %254 = vst [vmem:[#allocation2 + $0x10] sm:$0xff] %v224
    %255 = vst [vmem:[#allocation2 + $0x18] sm:$0xff] %v229
    %256 = vst [vmem:[#allocation2 + $0x20] sm:$0xff] %v234
    %257 = vst [vmem:[#allocation2 + $0x28] sm:$0xff] %v239
    %258 = vst [vmem:[#allocation2 + $0x30] sm:$0xff] %v244
    %259 = vst [vmem:[#allocation2 + $0x38] sm:$0xff] %v249
    %v260 = vld [vmem:[#allocation9] sm:$0xff]
    %v261 = vld [vmem:[#allocation9 + $0x8] sm:$0xff]
    %v262 = vld [vmem:[#allocation9 + $0x10] sm:$0xff]
    %v263 = vld [vmem:[#allocation9 + $0x18] sm:$0xff]
    %v264 = vld [vmem:[#allocation11] sm:$0xff]
    %v265 = vld [vmem:[#allocation11 + $0x8] sm:$0xff]
    %v266 = vld [vmem:[#allocation11 + $0x10] sm:$0xff]
    %v267 = vld [vmem:[#allocation11 + $0x18] sm:$0xff]
    %v268 = vld [vmem:[#allocation11 + $0x20] sm:$0xff]
    %v269 = vld [vmem:[#allocation11 + $0x28] sm:$0xff]
    %v270 = vld [vmem:[#allocation12] sm:$0x1]
    %v272 = vlaneseq
    %v273 = vshrl.u32 %v272, 7
    %v274 = vsub.s32 0, %v273
    %v275 = vrot.slane %v270, %v274
    %v277 = vld [vmem:[#allocation2] sm:$0xff]
    %vm278 = vcmask 261120
    %v280 = vsel %vm278, 0.0, 0
    %282 = vmatprep.subr.mxu0 0.0
    %283 = vmatpush1.msra.mxu0 %v260
    %284 = vmatprep.subr.mxu0 0.0
    %285 = vmatpush1.msra.mxu0 %v261
    %286 = vmatprep.subr.mxu0 0.0
    %287 = vmatpush1.msra.mxu0 %v262
    %288 = vmatprep.subr.mxu0 0.0
    %289 = vmatpush1.msra.mxu0 %v263
    %290 = vmatprep.subr.mxu0 0.0
    %291 = vmatpush1.msra.mxu0 0.0
    %292 = vmatprep.subr.mxu0 0.0
    %293 = vmatpush1.msra.mxu0 0.0
    %294 = vmatprep.subr.mxu0 0.0
    %295 = vmatpush1.msra.mxu0 0.0
    %296 = vmatprep.subr.mxu0 0.0
    %297 = vmatpush1.msra.mxu0 0.0
    %298 = vmatprep.subr.mxu0 0.0
    %299 = vmatpush1.msra.mxu0 0.0
    %300 = vmatprep.subr.mxu0 0.0
    %301 = vmatpush1.msra.mxu0 0.0
    %302 = vmatprep.subr.mxu0 0.0
    %303 = vmatpush1.msra.mxu0 0.0
    %304 = vmatprep.subr.mxu0 0.0
    %305 = vmatpush1.msra.mxu0 0.0
    %306 = vmatprep.subr.mxu0 0.0
    %307 = vmatpush1.msra.mxu0 0.0
    %308 = vmatprep.subr.mxu0 0.0
    %309 = vmatpush1.msra.mxu0 0.0
    %310 = vmatprep.subr.mxu0 0.0
    %311 = vmatpush1.msra.mxu0 0.0
    %312 = vmatprep.subr.mxu0 0.0
    %313 = vmatpush1.msra.mxu0 0.0
    %314 = vmatprep.subr.mxu0 0.0
    %315 = vmatpush1.msra.mxu0 0.0
    %316 = vmatprep.subr.mxu0 0.0
    %317 = vmatpush1.msra.mxu0 0.0
    %318 = vmatprep.subr.mxu0 0.0
    %319 = vmatpush1.msra.mxu0 0.0
    %320 = vmatprep.subr.mxu0 0.0
    %321 = vmatpush1.msra.mxu0 0.0
    %322 = vmatprep.subr.mxu0 0.0
    %323 = vmatpush1.msra.mxu0 0.0
    %324 = vmatprep.subr.mxu0 0.0
    %325 = vmatpush1.msra.mxu0 0.0
    %326 = vmatprep.subr.mxu0 0.0
    %327 = vmatpush1.msra.mxu0 0.0
    %328 = vmatprep.subr.mxu0 0.0
    %329 = vmatpush1.msra.mxu0 0.0
    %330 = vmatprep.subr.mxu0 0.0
    %331 = vmatpush1.msra.mxu0 0.0
    %332 = vmatprep.subr.mxu0 0.0
    %333 = vmatpush1.msra.mxu0 0.0
    %334 = vmatprep.subr.mxu0 0.0
    %335 = vmatpush1.msra.mxu0 0.0
    %336 = vmatprep.subr.mxu0 0.0
    %337 = vmatpush1.msra.mxu0 0.0
    %338 = vmatprep.subr.mxu0 0.0
    %339 = vmatpush1.msra.mxu0 0.0
    %340 = vmatprep.subr.mxu0 0.0
    %341 = vmatpush1.msra.mxu0 0.0
    %342 = vmatprep.subr.mxu0 0.0
    %343 = vmatpush1.msra.mxu0 0.0
    %344 = vmatprep.subr.mxu0 0.0
    %345 = vmatpush1.msra.mxu0 0.0
    %346 = vmatprep.mubr.f32.mxu0 0.0
    %347 = vmatmul.mubr.f32.gmra.mrb[0].mxu0 %v280
    %v348 = vpop.f32.mrb[0].mxu0
    %v349 = vadd.f32 0.0, %v348
    %v350 = vpop.f32.mrb[0].mxu0
    %351 = vdwg.mxu0
    %v352 = vadd.f32 %v277, %v349
    %v353 = vxor.u32 %v352, 2147483648
    %v354 = vmul.f32 %v353, 1.442695
    %v355 = vpow.pop %v354
    %v356 = vadd.f32 %v355, 1.0
    %v357 = vrcp.pop %v356
    %v358 = vmul.f32 1.0, %v357
    %v359 = vtanh.pop %v352
    %v360 = vmul.f32 %v358, 0.0
    %362 = vrot.lane.b32.xlu0 %v359, 64
    %v363 = vpop.permute.xlu0 %362
    %v365 = vmul.f32 %v358, %v363
    %367 = vrot.lane.b32.xlu0 %v365, 32
    %v368 = vpop.permute.xlu0 %367
    %v370 = vadd.f32 %v360, %v368
    %v371 = vtanh.pop %v370
    %373 = vrot.lane.b32.xlu0 %v371, 64
    %v374 = vpop.permute.xlu0 %373
    %v376 = vmul.f32 %v358, %v374
    %378 = vrot.lane.b32.xlu0 %v376, 32
    %v379 = vpop.permute.xlu0 %378
    %v381 = vsel %vm278, %v379, 0.0
    %vm382 = vcmask 392192
    %v384 = vsel %vm382, %v381, 0
    %386 = vmatprep.subr.mxu0 0.0
    %387 = vmatpush1.msra.mxu0 %v264
    %388 = vmatprep.subr.mxu0 0.0
    %389 = vmatpush1.msra.mxu0 %v265
    %390 = vmatprep.subr.mxu0 0.0
    %391 = vmatpush1.msra.mxu0 %v266
    %392 = vmatprep.subr.mxu0 0.0
    %393 = vmatpush1.msra.mxu0 %v267
    %394 = vmatprep.subr.mxu0 0.0
    %395 = vmatpush1.msra.mxu0 %v268
    %396 = vmatprep.subr.mxu0 0.0
    %397 = vmatpush1.msra.mxu0 %v269
    %398 = vmatprep.subr.mxu0 0.0
    %399 = vmatpush1.msra.mxu0 0.0
    %400 = vmatprep.subr.mxu0 0.0
    %401 = vmatpush1.msra.mxu0 0.0
    %402 = vmatprep.subr.mxu0 0.0
    %403 = vmatpush1.msra.mxu0 0.0
    %404 = vmatprep.subr.mxu0 0.0
    %405 = vmatpush1.msra.mxu0 0.0
    %406 = vmatprep.subr.mxu0 0.0
    %407 = vmatpush1.msra.mxu0 0.0
    %408 = vmatprep.subr.mxu0 0.0
    %409 = vmatpush1.msra.mxu0 0.0
    %410 = vmatprep.subr.mxu0 0.0
    %411 = vmatpush1.msra.mxu0 0.0
    %412 = vmatprep.subr.mxu0 0.0
    %413 = vmatpush1.msra.mxu0 0.0
    %414 = vmatprep.subr.mxu0 0.0
    %415 = vmatpush1.msra.mxu0 0.0
    %416 = vmatprep.subr.mxu0 0.0
    %417 = vmatpush1.msra.mxu0 0.0
    %418 = vmatprep.subr.mxu0 0.0
    %419 = vmatpush1.msra.mxu0 0.0
    %420 = vmatprep.subr.mxu0 0.0
    %421 = vmatpush1.msra.mxu0 0.0
    %422 = vmatprep.subr.mxu0 0.0
    %423 = vmatpush1.msra.mxu0 0.0
    %424 = vmatprep.subr.mxu0 0.0
    %425 = vmatpush1.msra.mxu0 0.0
    %426 = vmatprep.subr.mxu0 0.0
    %427 = vmatpush1.msra.mxu0 0.0
    %428 = vmatprep.subr.mxu0 0.0
    %429 = vmatpush1.msra.mxu0 0.0
    %430 = vmatprep.subr.mxu0 0.0
    %431 = vmatpush1.msra.mxu0 0.0
    %432 = vmatprep.subr.mxu0 0.0
    %433 = vmatpush1.msra.mxu0 0.0
    %434 = vmatprep.subr.mxu0 0.0
    %435 = vmatpush1.msra.mxu0 0.0
    %436 = vmatprep.subr.mxu0 0.0
    %437 = vmatpush1.msra.mxu0 0.0
    %438 = vmatprep.subr.mxu0 0.0
    %439 = vmatpush1.msra.mxu0 0.0
    %440 = vmatprep.subr.mxu0 0.0
    %441 = vmatpush1.msra.mxu0 0.0
    %442 = vmatprep.subr.mxu0 0.0
    %443 = vmatpush1.msra.mxu0 0.0
    %444 = vmatprep.subr.mxu0 0.0
    %445 = vmatpush1.msra.mxu0 0.0
    %446 = vmatprep.subr.mxu0 0.0
    %447 = vmatpush1.msra.mxu0 0.0
    %448 = vmatprep.subr.mxu0 0.0
    %449 = vmatpush1.msra.mxu0 0.0
    %450 = vmatprep.mubr.f32.mxu0 0.0
    %451 = vmatmul.mubr.f32.gmra.mrb[0].mxu0 %v384
    %v452 = vpop.f32.mrb[0].mxu0
    %v453 = vadd.f32 %v275, %v452
    %v454 = vpop.f32.mrb[0].mxu0
    %455 = vdwg.mxu0
    %v456 = vxor.u32 %v453, 2147483648
    %v457 = vmul.f32 %v456, 1.442695
    %v458 = vpow.pop %v457
    %v459 = vadd.f32 %v458, 1.0
    %v460 = vrcp.pop %v459
    %v461 = vmul.f32 1.0, %v460
    %v462 = vtanh.pop %v453
    %v463 = vmul.f32 %v461, 0.0
    %465 = vrot.lane.b32.xlu0 %v462, 96
    %v466 = vpop.permute.xlu0 %465
    %v468 = vmul.f32 %v461, %v466
    %470 = vrot.lane.b32.xlu0 %v468, 16
    %v471 = vpop.permute.xlu0 %470
    %v473 = vadd.f32 %v463, %v471
    %v474 = vtanh.pop %v473
    %476 = vrot.lane.b32.xlu0 %v474, 32
    %v477 = vpop.permute.xlu0 %476
    %v479 = vmul.f32 %v461, %v477
    %480 = vst.msk [vmem:[#allocation14] sm:$0xff] %vm278, %v379
    %482 = vrot.lane.b32.xlu0 %v479, 80
    %v483 = vpop.permute.xlu0 %482
    %485 = vst.msk [vmem:[#allocation15] sm:$0xff] %vm122, %v483
    %s486 = scalar_lea.vmem [#allocation2], 8
    %v487 = vld [vmem:[%s486] sm:$0xff]
    %v488 = vsel %vm278, %v379, 0
    %490 = vmatprep.subr.mxu0 0.0
    %491 = vmatpush1.msra.mxu0 %v260
    %492 = vmatprep.subr.mxu0 0.0
    %493 = vmatpush1.msra.mxu0 %v261
    %494 = vmatprep.subr.mxu0 0.0
    %495 = vmatpush1.msra.mxu0 %v262
    %496 = vmatprep.subr.mxu0 0.0
    %497 = vmatpush1.msra.mxu0 %v263
    %498 = vmatprep.subr.mxu0 0.0
    %499 = vmatpush1.msra.mxu0 0.0
    %500 = vmatprep.subr.mxu0 0.0
    %501 = vmatpush1.msra.mxu0 0.0
    %502 = vmatprep.subr.mxu0 0.0
    %503 = vmatpush1.msra.mxu0 0.0
    %504 = vmatprep.subr.mxu0 0.0
    %505 = vmatpush1.msra.mxu0 0.0
    %506 = vmatprep.subr.mxu0 0.0
    %507 = vmatpush1.msra.mxu0 0.0
    %508 = vmatprep.subr.mxu0 0.0
    %509 = vmatpush1.msra.mxu0 0.0
    %510 = vmatprep.subr.mxu0 0.0
    %511 = vmatpush1.msra.mxu0 0.0
    %512 = vmatprep.subr.mxu0 0.0
    %513 = vmatpush1.msra.mxu0 0.0
    %514 = vmatprep.subr.mxu0 0.0
    %515 = vmatpush1.msra.mxu0 0.0
    %516 = vmatprep.subr.mxu0 0.0
    %517 = vmatpush1.msra.mxu0 0.0
    %518 = vmatprep.subr.mxu0 0.0
    %519 = vmatpush1.msra.mxu0 0.0
    %520 = vmatprep.subr.mxu0 0.0
    %521 = vmatpush1.msra.mxu0 0.0
    %522 = vmatprep.subr.mxu0 0.0
    %523 = vmatpush1.msra.mxu0 0.0
    %524 = vmatprep.subr.mxu0 0.0
    %525 = vmatpush1.msra.mxu0 0.0
    %526 = vmatprep.subr.mxu0 0.0
    %527 = vmatpush1.msra.mxu0 0.0
    %528 = vmatprep.subr.mxu0 0.0
    %529 = vmatpush1.msra.mxu0 0.0
    %530 = vmatprep.subr.mxu0 0.0
    %531 = vmatpush1.msra.mxu0 0.0
    %532 = vmatprep.subr.mxu0 0.0
    %533 = vmatpush1.msra.mxu0 0.0
    %534 = vmatprep.subr.mxu0 0.0
    %535 = vmatpush1.msra.mxu0 0.0
    %536 = vmatprep.subr.mxu0 0.0
    %537 = vmatpush1.msra.mxu0 0.0
    %538 = vmatprep.subr.mxu0 0.0
    %539 = vmatpush1.msra.mxu0 0.0
    %540 = vmatprep.subr.mxu0 0.0
    %541 = vmatpush1.msra.mxu0 0.0
    %542 = vmatprep.subr.mxu0 0.0
    %543 = vmatpush1.msra.mxu0 0.0
    %544 = vmatprep.subr.mxu0 0.0
    %545 = vmatpush1.msra.mxu0 0.0
    %546 = vmatprep.subr.mxu0 0.0
    %547 = vmatpush1.msra.mxu0 0.0
    %548 = vmatprep.subr.mxu0 0.0
    %549 = vmatpush1.msra.mxu0 0.0
    %550 = vmatprep.subr.mxu0 0.0
    %551 = vmatpush1.msra.mxu0 0.0
    %552 = vmatprep.subr.mxu0 0.0
    %553 = vmatpush1.msra.mxu0 0.0
    %554 = vmatprep.mubr.f32.mxu0 0.0
    %555 = vmatmul.mubr.f32.gmra.mrb[0].mxu0 %v488
    %v556 = vpop.f32.mrb[0].mxu0
    %v557 = vadd.f32 0.0, %v556
    %v558 = vpop.f32.mrb[0].mxu0
    %559 = vdwg.mxu0
    %v560 = vadd.f32 %v487, %v557
    %v561 = vxor.u32 %v560, 2147483648
    %v562 = vmul.f32 %v561, 1.442695
    %v563 = vpow.pop %v562
    %v564 = vadd.f32 %v563, 1.0
    %v565 = vrcp.pop %v564
    %v566 = vmul.f32 1.0, %v565
    %v567 = vtanh.pop %v560
    %v568 = vmul.f32 %v566, %v370
    %570 = vrot.lane.b32.xlu0 %v567, 64
    %v571 = vpop.permute.xlu0 %570
    %v573 = vmul.f32 %v566, %v571
    %575 = vrot.lane.b32.xlu0 %v573, 32
    %v576 = vpop.permute.xlu0 %575
    %v578 = vadd.f32 %v568, %v576
    %v579 = vtanh.pop %v578
    %581 = vrot.lane.b32.xlu0 %v579, 64
    %v582 = vpop.permute.xlu0 %581
    %v584 = vmul.f32 %v566, %v582
    %586 = vrot.lane.b32.xlu0 %v584, 32
    %v587 = vpop.permute.xlu0 %586
    %589 = vrot.lane.b32.xlu0 %v479, 112
    %v590 = vpop.permute.xlu0 %589
    %v592 = vsel %vm278, %v587, %v590
    %v594 = vsel %vm382, %v592, 0
    %596 = vmatprep.subr.mxu0 0.0
    %597 = vmatpush1.msra.mxu0 %v264
    %598 = vmatprep.subr.mxu0 0.0
    %599 = vmatpush1.msra.mxu0 %v265
    %600 = vmatprep.subr.mxu0 0.0
    %601 = vmatpush1.msra.mxu0 %v266
    %602 = vmatprep.subr.mxu0 0.0
    %603 = vmatpush1.msra.mxu0 %v267
    %604 = vmatprep.subr.mxu0 0.0
    %605 = vmatpush1.msra.mxu0 %v268
    %606 = vmatprep.subr.mxu0 0.0
    %607 = vmatpush1.msra.mxu0 %v269
    %608 = vmatprep.subr.mxu0 0.0
    %609 = vmatpush1.msra.mxu0 0.0
    %610 = vmatprep.subr.mxu0 0.0
    %611 = vmatpush1.msra.mxu0 0.0
    %612 = vmatprep.subr.mxu0 0.0
    %613 = vmatpush1.msra.mxu0 0.0
    %614 = vmatprep.subr.mxu0 0.0
    %615 = vmatpush1.msra.mxu0 0.0
    %616 = vmatprep.subr.mxu0 0.0
    %617 = vmatpush1.msra.mxu0 0.0
    %618 = vmatprep.subr.mxu0 0.0
    %619 = vmatpush1.msra.mxu0 0.0
    %620 = vmatprep.subr.mxu0 0.0
    %621 = vmatpush1.msra.mxu0 0.0
    %622 = vmatprep.subr.mxu0 0.0
    %623 = vmatpush1.msra.mxu0 0.0
    %624 = vmatprep.subr.mxu0 0.0
    %625 = vmatpush1.msra.mxu0 0.0
    %626 = vmatprep.subr.mxu0 0.0
    %627 = vmatpush1.msra.mxu0 0.0
    %628 = vmatprep.subr.mxu0 0.0
    %629 = vmatpush1.msra.mxu0 0.0
    %630 = vmatprep.subr.mxu0 0.0
    %631 = vmatpush1.msra.mxu0 0.0
    %632 = vmatprep.subr.mxu0 0.0
    %633 = vmatpush1.msra.mxu0 0.0
    %634 = vmatprep.subr.mxu0 0.0
    %635 = vmatpush1.msra.mxu0 0.0
    %636 = vmatprep.subr.mxu0 0.0
    %637 = vmatpush1.msra.mxu0 0.0
    %638 = vmatprep.subr.mxu0 0.0
    %639 = vmatpush1.msra.mxu0 0.0
    %640 = vmatprep.subr.mxu0 0.0
    %641 = vmatpush1.msra.mxu0 0.0
    %642 = vmatprep.subr.mxu0 0.0
    %643 = vmatpush1.msra.mxu0 0.0
    %644 = vmatprep.subr.mxu0 0.0
    %645 = vmatpush1.msra.mxu0 0.0
    %646 = vmatprep.subr.mxu0 0.0
    %647 = vmatpush1.msra.mxu0 0.0
    %648 = vmatprep.subr.mxu0 0.0
    %649 = vmatpush1.msra.mxu0 0.0
    %650 = vmatprep.subr.mxu0 0.0
    %651 = vmatpush1.msra.mxu0 0.0
    %652 = vmatprep.subr.mxu0 0.0
    %653 = vmatpush1.msra.mxu0 0.0
    %654 = vmatprep.subr.mxu0 0.0
    %655 = vmatpush1.msra.mxu0 0.0
    %656 = vmatprep.subr.mxu0 0.0
    %657 = vmatpush1.msra.mxu0 0.0
    %658 = vmatprep.subr.mxu0 0.0
    %659 = vmatpush1.msra.mxu0 0.0
    %660 = vmatprep.mubr.f32.mxu0 0.0
    %661 = vmatmul.mubr.f32.gmra.mrb[0].mxu0 %v594
    %v662 = vpop.f32.mrb[0].mxu0
    %v663 = vadd.f32 %v275, %v662
    %v664 = vpop.f32.mrb[0].mxu0
    %665 = vdwg.mxu0
    %v666 = vxor.u32 %v663, 2147483648
    %v667 = vmul.f32 %v666, 1.442695
    %v668 = vpow.pop %v667
    %v669 = vadd.f32 %v668, 1.0
    %v670 = vrcp.pop %v669
    %v671 = vmul.f32 1.0, %v670
    %v672 = vtanh.pop %v663
    %v673 = vmul.f32 %v671, %v473
    %675 = vrot.lane.b32.xlu0 %v672, 96
    %v676 = vpop.permute.xlu0 %675
    %v678 = vmul.f32 %v671, %v676
    %680 = vrot.lane.b32.xlu0 %v678, 16
    %v681 = vpop.permute.xlu0 %680
    %v683 = vadd.f32 %v673, %v681
    %v684 = vtanh.pop %v683
    %686 = vrot.lane.b32.xlu0 %v684, 32
    %v687 = vpop.permute.xlu0 %686
    %v689 = vmul.f32 %v671, %v687
    %s690 = scalar_lea.vmem [#allocation14], 8
    %691 = vst.msk [vmem:[%s690] sm:$0xff] %vm278, %v587
    %693 = vrot.lane.b32.xlu0 %v689, 80
    %v694 = vpop.permute.xlu0 %693
    %s696 = scalar_lea.vmem [#allocation15], 8
    %697 = vst.msk [vmem:[%s696] sm:$0xff] %vm122, %v694
    %s698 = scalar_lea.vmem [#allocation2], 16
    %v699 = vld [vmem:[%s698] sm:$0xff]
    %v700 = vsel %vm278, %v587, 0
    %702 = vmatprep.subr.mxu0 0.0
    %703 = vmatpush1.msra.mxu0 %v260
    %704 = vmatprep.subr.mxu0 0.0
    %705 = vmatpush1.msra.mxu0 %v261
    %706 = vmatprep.subr.mxu0 0.0
    %707 = vmatpush1.msra.mxu0 %v262
    %708 = vmatprep.subr.mxu0 0.0
    %709 = vmatpush1.msra.mxu0 %v263
    %710 = vmatprep.subr.mxu0 0.0
    %711 = vmatpush1.msra.mxu0 0.0
    %712 = vmatprep.subr.mxu0 0.0
    %713 = vmatpush1.msra.mxu0 0.0
    %714 = vmatprep.subr.mxu0 0.0
    %715 = vmatpush1.msra.mxu0 0.0
    %716 = vmatprep.subr.mxu0 0.0
    %717 = vmatpush1.msra.mxu0 0.0
    %718 = vmatprep.subr.mxu0 0.0
    %719 = vmatpush1.msra.mxu0 0.0
    %720 = vmatprep.subr.mxu0 0.0
    %721 = vmatpush1.msra.mxu0 0.0
    %722 = vmatprep.subr.mxu0 0.0
    %723 = vmatpush1.msra.mxu0 0.0
    %724 = vmatprep.subr.mxu0 0.0
    %725 = vmatpush1.msra.mxu0 0.0
    %726 = vmatprep.subr.mxu0 0.0
    %727 = vmatpush1.msra.mxu0 0.0
    %728 = vmatprep.subr.mxu0 0.0
    %729 = vmatpush1.msra.mxu0 0.0
    %730 = vmatprep.subr.mxu0 0.0
    %731 = vmatpush1.msra.mxu0 0.0
    %732 = vmatprep.subr.mxu0 0.0
    %733 = vmatpush1.msra.mxu0 0.0
    %734 = vmatprep.subr.mxu0 0.0
    %735 = vmatpush1.msra.mxu0 0.0
    %736 = vmatprep.subr.mxu0 0.0
    %737 = vmatpush1.msra.mxu0 0.0
    %738 = vmatprep.subr.mxu0 0.0
    %739 = vmatpush1.msra.mxu0 0.0
    %740 = vmatprep.subr.mxu0 0.0
    %741 = vmatpush1.msra.mxu0 0.0
    %742 = vmatprep.subr.mxu0 0.0
    %743 = vmatpush1.msra.mxu0 0.0
    %744 = vmatprep.subr.mxu0 0.0
    %745 = vmatpush1.msra.mxu0 0.0
    %746 = vmatprep.subr.mxu0 0.0
    %747 = vmatpush1.msra.mxu0 0.0
    %748 = vmatprep.subr.mxu0 0.0
    %749 = vmatpush1.msra.mxu0 0.0
    %750 = vmatprep.subr.mxu0 0.0
    %751 = vmatpush1.msra.mxu0 0.0
    %752 = vmatprep.subr.mxu0 0.0
    %753 = vmatpush1.msra.mxu0 0.0
    %754 = vmatprep.subr.mxu0 0.0
    %755 = vmatpush1.msra.mxu0 0.0
    %756 = vmatprep.subr.mxu0 0.0
    %757 = vmatpush1.msra.mxu0 0.0
    %758 = vmatprep.subr.mxu0 0.0
    %759 = vmatpush1.msra.mxu0 0.0
    %760 = vmatprep.subr.mxu0 0.0
    %761 = vmatpush1.msra.mxu0 0.0
    %762 = vmatprep.subr.mxu0 0.0
    %763 = vmatpush1.msra.mxu0 0.0
    %764 = vmatprep.subr.mxu0 0.0
    %765 = vmatpush1.msra.mxu0 0.0
    %766 = vmatprep.mubr.f32.mxu0 0.0
    %767 = vmatmul.mubr.f32.gmra.mrb[0].mxu0 %v700
    %v768 = vpop.f32.mrb[0].mxu0
    %v769 = vadd.f32 0.0, %v768
    %v770 = vpop.f32.mrb[0].mxu0
    %771 = vdwg.mxu0
    %v772 = vadd.f32 %v699, %v769
    %v773 = vxor.u32 %v772, 2147483648
    %v774 = vmul.f32 %v773, 1.442695
    %v775 = vpow.pop %v774
    %v776 = vadd.f32 %v775, 1.0
    %v777 = vrcp.pop %v776
    %v778 = vmul.f32 1.0, %v777
    %v779 = vtanh.pop %v772
    %v780 = vmul.f32 %v778, %v578
    %782 = vrot.lane.b32.xlu0 %v779, 64
    %v783 = vpop.permute.xlu0 %782
    %v785 = vmul.f32 %v778, %v783
    %787 = vrot.lane.b32.xlu0 %v785, 32
    %v788 = vpop.permute.xlu0 %787
    %v790 = vadd.f32 %v780, %v788
    %v791 = vtanh.pop %v790
    %793 = vrot.lane.b32.xlu0 %v791, 64
    %v794 = vpop.permute.xlu0 %793
    %v796 = vmul.f32 %v778, %v794
    %798 = vrot.lane.b32.xlu0 %v796, 32
    %v799 = vpop.permute.xlu0 %798
    %801 = vrot.lane.b32.xlu0 %v689, 112
    %v802 = vpop.permute.xlu0 %801
    %v804 = vsel %vm278, %v799, %v802
    %v806 = vsel %vm382, %v804, 0
    %808 = vmatprep.subr.mxu0 0.0
    %809 = vmatpush1.msra.mxu0 %v264
    %810 = vmatprep.subr.mxu0 0.0
    %811 = vmatpush1.msra.mxu0 %v265
    %812 = vmatprep.subr.mxu0 0.0
    %813 = vmatpush1.msra.mxu0 %v266
    %814 = vmatprep.subr.mxu0 0.0
    %815 = vmatpush1.msra.mxu0 %v267
    %816 = vmatprep.subr.mxu0 0.0
    %817 = vmatpush1.msra.mxu0 %v268
    %818 = vmatprep.subr.mxu0 0.0
    %819 = vmatpush1.msra.mxu0 %v269
    %820 = vmatprep.subr.mxu0 0.0
    %821 = vmatpush1.msra.mxu0 0.0
    %822 = vmatprep.subr.mxu0 0.0
    %823 = vmatpush1.msra.mxu0 0.0
    %824 = vmatprep.subr.mxu0 0.0
    %825 = vmatpush1.msra.mxu0 0.0
    %826 = vmatprep.subr.mxu0 0.0
    %827 = vmatpush1.msra.mxu0 0.0
    %828 = vmatprep.subr.mxu0 0.0
    %829 = vmatpush1.msra.mxu0 0.0
    %830 = vmatprep.subr.mxu0 0.0
    %831 = vmatpush1.msra.mxu0 0.0
    %832 = vmatprep.subr.mxu0 0.0
    %833 = vmatpush1.msra.mxu0 0.0
    %834 = vmatprep.subr.mxu0 0.0
    %835 = vmatpush1.msra.mxu0 0.0
    %836 = vmatprep.subr.mxu0 0.0
    %837 = vmatpush1.msra.mxu0 0.0
    %838 = vmatprep.subr.mxu0 0.0
    %839 = vmatpush1.msra.mxu0 0.0
    %840 = vmatprep.subr.mxu0 0.0
    %841 = vmatpush1.msra.mxu0 0.0
    %842 = vmatprep.subr.mxu0 0.0
    %843 = vmatpush1.msra.mxu0 0.0
    %844 = vmatprep.subr.mxu0 0.0
    %845 = vmatpush1.msra.mxu0 0.0
    %846 = vmatprep.subr.mxu0 0.0
    %847 = vmatpush1.msra.mxu0 0.0
    %848 = vmatprep.subr.mxu0 0.0
    %849 = vmatpush1.msra.mxu0 0.0
    %850 = vmatprep.subr.mxu0 0.0
    %851 = vmatpush1.msra.mxu0 0.0
    %852 = vmatprep.subr.mxu0 0.0
    %853 = vmatpush1.msra.mxu0 0.0
    %854 = vmatprep.subr.mxu0 0.0
    %855 = vmatpush1.msra.mxu0 0.0
    %856 = vmatprep.subr.mxu0 0.0
    %857 = vmatpush1.msra.mxu0 0.0
    %858 = vmatprep.subr.mxu0 0.0
    %859 = vmatpush1.msra.mxu0 0.0
    %860 = vmatprep.subr.mxu0 0.0
    %861 = vmatpush1.msra.mxu0 0.0
    %862 = vmatprep.subr.mxu0 0.0
    %863 = vmatpush1.msra.mxu0 0.0
    %864 = vmatprep.subr.mxu0 0.0
    %865 = vmatpush1.msra.mxu0 0.0
    %866 = vmatprep.subr.mxu0 0.0
    %867 = vmatpush1.msra.mxu0 0.0
    %868 = vmatprep.subr.mxu0 0.0
    %869 = vmatpush1.msra.mxu0 0.0
    %870 = vmatprep.subr.mxu0 0.0
    %871 = vmatpush1.msra.mxu0 0.0
    %872 = vmatprep.mubr.f32.mxu0 0.0
    %873 = vmatmul.mubr.f32.gmra.mrb[0].mxu0 %v806
    %v874 = vpop.f32.mrb[0].mxu0
    %v875 = vadd.f32 %v275, %v874
    %v876 = vpop.f32.mrb[0].mxu0
    %877 = vdwg.mxu0
    %v878 = vxor.u32 %v875, 2147483648
    %v879 = vmul.f32 %v878, 1.442695
    %v880 = vpow.pop %v879
    %v881 = vadd.f32 %v880, 1.0
    %v882 = vrcp.pop %v881
    %v883 = vmul.f32 1.0, %v882
    %v884 = vtanh.pop %v875
    %v885 = vmul.f32 %v883, %v683
    %887 = vrot.lane.b32.xlu0 %v884, 96
    %v888 = vpop.permute.xlu0 %887
    %v890 = vmul.f32 %v883, %v888
    %892 = vrot.lane.b32.xlu0 %v890, 16
    %v893 = vpop.permute.xlu0 %892
    %v895 = vadd.f32 %v885, %v893
    %v896 = vtanh.pop %v895
    %898 = vrot.lane.b32.xlu0 %v896, 32
    %v899 = vpop.permute.xlu0 %898
    %v901 = vmul.f32 %v883, %v899
    %s902 = scalar_lea.vmem [#allocation14], 16
    %903 = vst.msk [vmem:[%s902] sm:$0xff] %vm278, %v799
    %905 = vrot.lane.b32.xlu0 %v901, 80
    %v906 = vpop.permute.xlu0 %905
    %s908 = scalar_lea.vmem [#allocation15], 16
    %909 = vst.msk [vmem:[%s908] sm:$0xff] %vm122, %v906
    %s910 = scalar_lea.vmem [#allocation2], 24
    %v911 = vld [vmem:[%s910] sm:$0xff]
    %v912 = vsel %vm278, %v799, 0
    %914 = vmatprep.subr.mxu0 0.0
    %915 = vmatpush1.msra.mxu0 %v260
    %916 = vmatprep.subr.mxu0 0.0
    %917 = vmatpush1.msra.mxu0 %v261
    %918 = vmatprep.subr.mxu0 0.0
    %919 = vmatpush1.msra.mxu0 %v262
    %920 = vmatprep.subr.mxu0 0.0
    %921 = vmatpush1.msra.mxu0 %v263
    %922 = vmatprep.subr.mxu0 0.0
    %923 = vmatpush1.msra.mxu0 0.0
    %924 = vmatprep.subr.mxu0 0.0
    %925 = vmatpush1.msra.mxu0 0.0
    %926 = vmatprep.subr.mxu0 0.0
    %927 = vmatpush1.msra.mxu0 0.0
    %928 = vmatprep.subr.mxu0 0.0
    %929 = vmatpush1.msra.mxu0 0.0
    %930 = vmatprep.subr.mxu0 0.0
    %931 = vmatpush1.msra.mxu0 0.0
    %932 = vmatprep.subr.mxu0 0.0
    %933 = vmatpush1.msra.mxu0 0.0
    %934 = vmatprep.subr.mxu0 0.0
    %935 = vmatpush1.msra.mxu0 0.0
    %936 = vmatprep.subr.mxu0 0.0
    %937 = vmatpush1.msra.mxu0 0.0
    %938 = vmatprep.subr.mxu0 0.0
    %939 = vmatpush1.msra.mxu0 0.0
    %940 = vmatprep.subr.mxu0 0.0
    %941 = vmatpush1.msra.mxu0 0.0
    %942 = vmatprep.subr.mxu0 0.0
    %943 = vmatpush1.msra.mxu0 0.0
    %944 = vmatprep.subr.mxu0 0.0
    %945 = vmatpush1.msra.mxu0 0.0
    %946 = vmatprep.subr.mxu0 0.0
    %947 = vmatpush1.msra.mxu0 0.0
    %948 = vmatprep.subr.mxu0 0.0
    %949 = vmatpush1.msra.mxu0 0.0
    %950 = vmatprep.subr.mxu0 0.0
    %951 = vmatpush1.msra.mxu0 0.0
    %952 = vmatprep.subr.mxu0 0.0
    %953 = vmatpush1.msra.mxu0 0.0
    %954 = vmatprep.subr.mxu0 0.0
    %955 = vmatpush1.msra.mxu0 0.0
    %956 = vmatprep.subr.mxu0 0.0
    %957 = vmatpush1.msra.mxu0 0.0
    %958 = vmatprep.subr.mxu0 0.0
    %959 = vmatpush1.msra.mxu0 0.0
    %960 = vmatprep.subr.mxu0 0.0
    %961 = vmatpush1.msra.mxu0 0.0
    %962 = vmatprep.subr.mxu0 0.0
    %963 = vmatpush1.msra.mxu0 0.0
    %964 = vmatprep.subr.mxu0 0.0
    %965 = vmatpush1.msra.mxu0 0.0
    %966 = vmatprep.subr.mxu0 0.0
    %967 = vmatpush1.msra.mxu0 0.0
    %968 = vmatprep.subr.mxu0 0.0
    %969 = vmatpush1.msra.mxu0 0.0
    %970 = vmatprep.subr.mxu0 0.0
    %971 = vmatpush1.msra.mxu0 0.0
    %972 = vmatprep.subr.mxu0 0.0
    %973 = vmatpush1.msra.mxu0 0.0
    %974 = vmatprep.subr.mxu0 0.0
    %975 = vmatpush1.msra.mxu0 0.0
    %976 = vmatprep.subr.mxu0 0.0
    %977 = vmatpush1.msra.mxu0 0.0
    %978 = vmatprep.mubr.f32.mxu0 0.0
    %979 = vmatmul.mubr.f32.gmra.mrb[0].mxu0 %v912
    %v980 = vpop.f32.mrb[0].mxu0
    %v981 = vadd.f32 0.0, %v980
    %v982 = vpop.f32.mrb[0].mxu0
    %983 = vdwg.mxu0
    %v984 = vadd.f32 %v911, %v981
    %v985 = vxor.u32 %v984, 2147483648
    %v986 = vmul.f32 %v985, 1.442695
    %v987 = vpow.pop %v986
    %v988 = vadd.f32 %v987, 1.0
    %v989 = vrcp.pop %v988
    %v990 = vmul.f32 1.0, %v989
    %v991 = vtanh.pop %v984
    %v992 = vmul.f32 %v990, %v790
    %994 = vrot.lane.b32.xlu0 %v991, 64
    %v995 = vpop.permute.xlu0 %994
    %v997 = vmul.f32 %v990, %v995
    %999 = vrot.lane.b32.xlu0 %v997, 32
    %v1000 = vpop.permute.xlu0 %999
    %v1002 = vadd.f32 %v992, %v1000
    %v1003 = vtanh.pop %v1002
    %1005 = vrot.lane.b32.xlu0 %v1003, 64
    %v1006 = vpop.permute.xlu0 %1005
    %v1008 = vmul.f32 %v990, %v1006
    %1010 = vrot.lane.b32.xlu0 %v1008, 32
    %v1011 = vpop.permute.xlu0 %1010
    %1013 = vrot.lane.b32.xlu0 %v901, 112
    %v1014 = vpop.permute.xlu0 %1013
    %v1016 = vsel %vm278, %v1011, %v1014
    %v1018 = vsel %vm382, %v1016, 0
    %1020 = vmatprep.subr.mxu0 0.0
    %1021 = vmatpush1.msra.mxu0 %v264
    %1022 = vmatprep.subr.mxu0 0.0
    %1023 = vmatpush1.msra.mxu0 %v265
    %1024 = vmatprep.subr.mxu0 0.0
    %1025 = vmatpush1.msra.mxu0 %v266
    %1026 = vmatprep.subr.mxu0 0.0
    %1027 = vmatpush1.msra.mxu0 %v267
    %1028 = vmatprep.subr.mxu0 0.0
    %1029 = vmatpush1.msra.mxu0 %v268
    %1030 = vmatprep.subr.mxu0 0.0
    %1031 = vmatpush1.msra.mxu0 %v269
    %1032 = vmatprep.subr.mxu0 0.0
    %1033 = vmatpush1.msra.mxu0 0.0
    %1034 = vmatprep.subr.mxu0 0.0
    %1035 = vmatpush1.msra.mxu0 0.0
    %1036 = vmatprep.subr.mxu0 0.0
    %1037 = vmatpush1.msra.mxu0 0.0
    %1038 = vmatprep.subr.mxu0 0.0
    %1039 = vmatpush1.msra.mxu0 0.0
    %1040 = vmatprep.subr.mxu0 0.0
    %1041 = vmatpush1.msra.mxu0 0.0
    %1042 = vmatprep.subr.mxu0 0.0
    %1043 = vmatpush1.msra.mxu0 0.0
    %1044 = vmatprep.subr.mxu0 0.0
    %1045 = vmatpush1.msra.mxu0 0.0
    %1046 = vmatprep.subr.mxu0 0.0
    %1047 = vmatpush1.msra.mxu0 0.0
    %1048 = vmatprep.subr.mxu0 0.0
    %1049 = vmatpush1.msra.mxu0 0.0
    %1050 = vmatprep.subr.mxu0 0.0
    %1051 = vmatpush1.msra.mxu0 0.0
    %1052 = vmatprep.subr.mxu0 0.0
    %1053 = vmatpush1.msra.mxu0 0.0
    %1054 = vmatprep.subr.mxu0 0.0
    %1055 = vmatpush1.msra.mxu0 0.0
    %1056 = vmatprep.subr.mxu0 0.0
    %1057 = vmatpush1.msra.mxu0 0.0
    %1058 = vmatprep.subr.mxu0 0.0
    %1059 = vmatpush1.msra.mxu0 0.0
    %1060 = vmatprep.subr.mxu0 0.0
    %1061 = vmatpush1.msra.mxu0 0.0
    %1062 = vmatprep.subr.mxu0 0.0
    %1063 = vmatpush1.msra.mxu0 0.0
    %1064 = vmatprep.subr.mxu0 0.0
    %1065 = vmatpush1.msra.mxu0 0.0
    %1066 = vmatprep.subr.mxu0 0.0
    %1067 = vmatpush1.msra.mxu0 0.0
    %1068 = vmatprep.subr.mxu0 0.0
    %1069 = vmatpush1.msra.mxu0 0.0
    %1070 = vmatprep.subr.mxu0 0.0
    %1071 = vmatpush1.msra.mxu0 0.0
    %1072 = vmatprep.subr.mxu0 0.0
    %1073 = vmatpush1.msra.mxu0 0.0
    %1074 = vmatprep.subr.mxu0 0.0
    %1075 = vmatpush1.msra.mxu0 0.0
    %1076 = vmatprep.subr.mxu0 0.0
    %1077 = vmatpush1.msra.mxu0 0.0
    %1078 = vmatprep.subr.mxu0 0.0
    %1079 = vmatpush1.msra.mxu0 0.0
    %1080 = vmatprep.subr.mxu0 0.0
    %1081 = vmatpush1.msra.mxu0 0.0
    %1082 = vmatprep.subr.mxu0 0.0
    %1083 = vmatpush1.msra.mxu0 0.0
    %1084 = vmatprep.mubr.f32.mxu0 0.0
    %1085 = vmatmul.mubr.f32.gmra.mrb[0].mxu0 %v1018
    %v1086 = vpop.f32.mrb[0].mxu0
    %v1087 = vadd.f32 %v275, %v1086
    %v1088 = vpop.f32.mrb[0].mxu0
    %1089 = vdwg.mxu0
    %v1090 = vxor.u32 %v1087, 2147483648
    %v1091 = vmul.f32 %v1090, 1.442695
    %v1092 = vpow.pop %v1091
    %v1093 = vadd.f32 %v1092, 1.0
    %v1094 = vrcp.pop %v1093
    %v1095 = vmul.f32 1.0, %v1094
    %v1096 = vtanh.pop %v1087
    %v1097 = vmul.f32 %v1095, %v895
    %1099 = vrot.lane.b32.xlu0 %v1096, 96
    %v1100 = vpop.permute.xlu0 %1099
    %v1102 = vmul.f32 %v1095, %v1100
    %1104 = vrot.lane.b32.xlu0 %v1102, 16
    %v1105 = vpop.permute.xlu0 %1104
    %v1107 = vadd.f32 %v1097, %v1105
    %v1108 = vtanh.pop %v1107
    %1110 = vrot.lane.b32.xlu0 %v1108, 32
    %v1111 = vpop.permute.xlu0 %1110
    %v1113 = vmul.f32 %v1095, %v1111
    %s1114 = scalar_lea.vmem [#allocation14], 24
    %1115 = vst.msk [vmem:[%s1114] sm:$0xff] %vm278, %v1011
    %1117 = vrot.lane.b32.xlu0 %v1113, 80
    %v1118 = vpop.permute.xlu0 %1117
    %s1120 = scalar_lea.vmem [#allocation15], 24
    %1121 = vst.msk [vmem:[%s1120] sm:$0xff] %vm122, %v1118
    %s1122 = scalar_lea.vmem [#allocation2], 32
    %v1123 = vld [vmem:[%s1122] sm:$0xff]
    %v1124 = vsel %vm278, %v1011, 0
    %1126 = vmatprep.subr.mxu0 0.0
    %1127 = vmatpush1.msra.mxu0 %v260
    %1128 = vmatprep.subr.mxu0 0.0
    %1129 = vmatpush1.msra.mxu0 %v261
    %1130 = vmatprep.subr.mxu0 0.0
    %1131 = vmatpush1.msra.mxu0 %v262
    %1132 = vmatprep.subr.mxu0 0.0
    %1133 = vmatpush1.msra.mxu0 %v263
    %1134 = vmatprep.subr.mxu0 0.0
    %1135 = vmatpush1.msra.mxu0 0.0
    %1136 = vmatprep.subr.mxu0 0.0
    %1137 = vmatpush1.msra.mxu0 0.0
    %1138 = vmatprep.subr.mxu0 0.0
    %1139 = vmatpush1.msra.mxu0 0.0
    %1140 = vmatprep.subr.mxu0 0.0
    %1141 = vmatpush1.msra.mxu0 0.0
    %1142 = vmatprep.subr.mxu0 0.0
    %1143 = vmatpush1.msra.mxu0 0.0
    %1144 = vmatprep.subr.mxu0 0.0
    %1145 = vmatpush1.msra.mxu0 0.0
    %1146 = vmatprep.subr.mxu0 0.0
    %1147 = vmatpush1.msra.mxu0 0.0
    %1148 = vmatprep.subr.mxu0 0.0
    %1149 = vmatpush1.msra.mxu0 0.0
    %1150 = vmatprep.subr.mxu0 0.0
    %1151 = vmatpush1.msra.mxu0 0.0
    %1152 = vmatprep.subr.mxu0 0.0
    %1153 = vmatpush1.msra.mxu0 0.0
    %1154 = vmatprep.subr.mxu0 0.0
    %1155 = vmatpush1.msra.mxu0 0.0
    %1156 = vmatprep.subr.mxu0 0.0
    %1157 = vmatpush1.msra.mxu0 0.0
    %1158 = vmatprep.subr.mxu0 0.0
    %1159 = vmatpush1.msra.mxu0 0.0
    %1160 = vmatprep.subr.mxu0 0.0
    %1161 = vmatpush1.msra.mxu0 0.0
    %1162 = vmatprep.subr.mxu0 0.0
    %1163 = vmatpush1.msra.mxu0 0.0
    %1164 = vmatprep.subr.mxu0 0.0
    %1165 = vmatpush1.msra.mxu0 0.0
    %1166 = vmatprep.subr.mxu0 0.0
    %1167 = vmatpush1.msra.mxu0 0.0
    %1168 = vmatprep.subr.mxu0 0.0
    %1169 = vmatpush1.msra.mxu0 0.0
    %1170 = vmatprep.subr.mxu0 0.0
    %1171 = vmatpush1.msra.mxu0 0.0
    %1172 = vmatprep.subr.mxu0 0.0
    %1173 = vmatpush1.msra.mxu0 0.0
    %1174 = vmatprep.subr.mxu0 0.0
    %1175 = vmatpush1.msra.mxu0 0.0
    %1176 = vmatprep.subr.mxu0 0.0
    %1177 = vmatpush1.msra.mxu0 0.0
    %1178 = vmatprep.subr.mxu0 0.0
    %1179 = vmatpush1.msra.mxu0 0.0
    %1180 = vmatprep.subr.mxu0 0.0
    %1181 = vmatpush1.msra.mxu0 0.0
    %1182 = vmatprep.subr.mxu0 0.0
    %1183 = vmatpush1.msra.mxu0 0.0
    %1184 = vmatprep.subr.mxu0 0.0
    %1185 = vmatpush1.msra.mxu0 0.0
    %1186 = vmatprep.subr.mxu0 0.0
    %1187 = vmatpush1.msra.mxu0 0.0
    %1188 = vmatprep.subr.mxu0 0.0
    %1189 = vmatpush1.msra.mxu0 0.0
    %1190 = vmatprep.mubr.f32.mxu0 0.0
    %1191 = vmatmul.mubr.f32.gmra.mrb[0].mxu0 %v1124
    %v1192 = vpop.f32.mrb[0].mxu0
    %v1193 = vadd.f32 0.0, %v1192
    %v1194 = vpop.f32.mrb[0].mxu0
    %1195 = vdwg.mxu0
    %v1196 = vadd.f32 %v1123, %v1193
    %v1197 = vxor.u32 %v1196, 2147483648
    %v1198 = vmul.f32 %v1197, 1.442695
    %v1199 = vpow.pop %v1198
    %v1200 = vadd.f32 %v1199, 1.0
    %v1201 = vrcp.pop %v1200
    %v1202 = vmul.f32 1.0, %v1201
    %v1203 = vtanh.pop %v1196
    %v1204 = vmul.f32 %v1202, %v1002
    %1206 = vrot.lane.b32.xlu0 %v1203, 64
    %v1207 = vpop.permute.xlu0 %1206
    %v1209 = vmul.f32 %v1202, %v1207
    %1211 = vrot.lane.b32.xlu0 %v1209, 32
    %v1212 = vpop.permute.xlu0 %1211
    %v1214 = vadd.f32 %v1204, %v1212
    %v1215 = vtanh.pop %v1214
    %1217 = vrot.lane.b32.xlu0 %v1215, 64
    %v1218 = vpop.permute.xlu0 %1217
    %v1220 = vmul.f32 %v1202, %v1218
    %1222 = vrot.lane.b32.xlu0 %v1220, 32
    %v1223 = vpop.permute.xlu0 %1222
    %1225 = vrot.lane.b32.xlu0 %v1113, 112
    %v1226 = vpop.permute.xlu0 %1225
    %v1228 = vsel %vm278, %v1223, %v1226
    %v1230 = vsel %vm382, %v1228, 0
    %1232 = vmatprep.subr.mxu0 0.0
    %1233 = vmatpush1.msra.mxu0 %v264
    %1234 = vmatprep.subr.mxu0 0.0
    %1235 = vmatpush1.msra.mxu0 %v265
    %1236 = vmatprep.subr.mxu0 0.0
    %1237 = vmatpush1.msra.mxu0 %v266
    %1238 = vmatprep.subr.mxu0 0.0
    %1239 = vmatpush1.msra.mxu0 %v267
    %1240 = vmatprep.subr.mxu0 0.0
    %1241 = vmatpush1.msra.mxu0 %v268
    %1242 = vmatprep.subr.mxu0 0.0
    %1243 = vmatpush1.msra.mxu0 %v269
    %1244 = vmatprep.subr.mxu0 0.0
    %1245 = vmatpush1.msra.mxu0 0.0
    %1246 = vmatprep.subr.mxu0 0.0
    %1247 = vmatpush1.msra.mxu0 0.0
    %1248 = vmatprep.subr.mxu0 0.0
    %1249 = vmatpush1.msra.mxu0 0.0
    %1250 = vmatprep.subr.mxu0 0.0
    %1251 = vmatpush1.msra.mxu0 0.0
    %1252 = vmatprep.subr.mxu0 0.0
    %1253 = vmatpush1.msra.mxu0 0.0
    %1254 = vmatprep.subr.mxu0 0.0
    %1255 = vmatpush1.msra.mxu0 0.0
    %1256 = vmatprep.subr.mxu0 0.0
    %1257 = vmatpush1.msra.mxu0 0.0
    %1258 = vmatprep.subr.mxu0 0.0
    %1259 = vmatpush1.msra.mxu0 0.0
    %1260 = vmatprep.subr.mxu0 0.0
    %1261 = vmatpush1.msra.mxu0 0.0
    %1262 = vmatprep.subr.mxu0 0.0
    %1263 = vmatpush1.msra.mxu0 0.0
    %1264 = vmatprep.subr.mxu0 0.0
    %1265 = vmatpush1.msra.mxu0 0.0
    %1266 = vmatprep.subr.mxu0 0.0
    %1267 = vmatpush1.msra.mxu0 0.0
    %1268 = vmatprep.subr.mxu0 0.0
    %1269 = vmatpush1.msra.mxu0 0.0
    %1270 = vmatprep.subr.mxu0 0.0
    %1271 = vmatpush1.msra.mxu0 0.0
    %1272 = vmatprep.subr.mxu0 0.0
    %1273 = vmatpush1.msra.mxu0 0.0
    %1274 = vmatprep.subr.mxu0 0.0
    %1275 = vmatpush1.msra.mxu0 0.0
    %1276 = vmatprep.subr.mxu0 0.0
    %1277 = vmatpush1.msra.mxu0 0.0
    %1278 = vmatprep.subr.mxu0 0.0
    %1279 = vmatpush1.msra.mxu0 0.0
    %1280 = vmatprep.subr.mxu0 0.0
    %1281 = vmatpush1.msra.mxu0 0.0
    %1282 = vmatprep.subr.mxu0 0.0
    %1283 = vmatpush1.msra.mxu0 0.0
    %1284 = vmatprep.subr.mxu0 0.0
    %1285 = vmatpush1.msra.mxu0 0.0
    %1286 = vmatprep.subr.mxu0 0.0
    %1287 = vmatpush1.msra.mxu0 0.0
    %1288 = vmatprep.subr.mxu0 0.0
    %1289 = vmatpush1.msra.mxu0 0.0
    %1290 = vmatprep.subr.mxu0 0.0
    %1291 = vmatpush1.msra.mxu0 0.0
    %1292 = vmatprep.subr.mxu0 0.0
    %1293 = vmatpush1.msra.mxu0 0.0
    %1294 = vmatprep.subr.mxu0 0.0
    %1295 = vmatpush1.msra.mxu0 0.0
    %1296 = vmatprep.mubr.f32.mxu0 0.0
    %1297 = vmatmul.mubr.f32.gmra.mrb[0].mxu0 %v1230
    %v1298 = vpop.f32.mrb[0].mxu0
    %v1299 = vadd.f32 %v275, %v1298
    %v1300 = vpop.f32.mrb[0].mxu0
    %1301 = vdwg.mxu0
    %v1302 = vxor.u32 %v1299, 2147483648
    %v1303 = vmul.f32 %v1302, 1.442695
    %v1304 = vpow.pop %v1303
    %v1305 = vadd.f32 %v1304, 1.0
    %v1306 = vrcp.pop %v1305
    %v1307 = vmul.f32 1.0, %v1306
    %v1308 = vtanh.pop %v1299
    %v1309 = vmul.f32 %v1307, %v1107
    %1311 = vrot.lane.b32.xlu0 %v1308, 96
    %v1312 = vpop.permute.xlu0 %1311
    %v1314 = vmul.f32 %v1307, %v1312
    %1316 = vrot.lane.b32.xlu0 %v1314, 16
    %v1317 = vpop.permute.xlu0 %1316
    %v1319 = vadd.f32 %v1309, %v1317
    %v1320 = vtanh.pop %v1319
    %1322 = vrot.lane.b32.xlu0 %v1320, 32
    %v1323 = vpop.permute.xlu0 %1322
    %v1325 = vmul.f32 %v1307, %v1323
    %s1326 = scalar_lea.vmem [#allocation14], 32
    %1327 = vst.msk [vmem:[%s1326] sm:$0xff] %vm278, %v1223
    %1329 = vrot.lane.b32.xlu0 %v1325, 80
    %v1330 = vpop.permute.xlu0 %1329
    %s1332 = scalar_lea.vmem [#allocation15], 32
    %1333 = vst.msk [vmem:[%s1332] sm:$0xff] %vm122, %v1330
    %s1334 = scalar_lea.vmem [#allocation2], 40
    %v1335 = vld [vmem:[%s1334] sm:$0xff]
    %v1336 = vsel %vm278, %v1223, 0
    %1338 = vmatprep.subr.mxu0 0.0
    %1339 = vmatpush1.msra.mxu0 %v260
    %1340 = vmatprep.subr.mxu0 0.0
    %1341 = vmatpush1.msra.mxu0 %v261
    %1342 = vmatprep.subr.mxu0 0.0
    %1343 = vmatpush1.msra.mxu0 %v262
    %1344 = vmatprep.subr.mxu0 0.0
    %1345 = vmatpush1.msra.mxu0 %v263
    %1346 = vmatprep.subr.mxu0 0.0
    %1347 = vmatpush1.msra.mxu0 0.0
    %1348 = vmatprep.subr.mxu0 0.0
    %1349 = vmatpush1.msra.mxu0 0.0
    %1350 = vmatprep.subr.mxu0 0.0
    %1351 = vmatpush1.msra.mxu0 0.0
    %1352 = vmatprep.subr.mxu0 0.0
    %1353 = vmatpush1.msra.mxu0 0.0
    %1354 = vmatprep.subr.mxu0 0.0
    %1355 = vmatpush1.msra.mxu0 0.0
    %1356 = vmatprep.subr.mxu0 0.0
    %1357 = vmatpush1.msra.mxu0 0.0
    %1358 = vmatprep.subr.mxu0 0.0
    %1359 = vmatpush1.msra.mxu0 0.0
    %1360 = vmatprep.subr.mxu0 0.0
    %1361 = vmatpush1.msra.mxu0 0.0
    %1362 = vmatprep.subr.mxu0 0.0
    %1363 = vmatpush1.msra.mxu0 0.0
    %1364 = vmatprep.subr.mxu0 0.0
    %1365 = vmatpush1.msra.mxu0 0.0
    %1366 = vmatprep.subr.mxu0 0.0
    %1367 = vmatpush1.msra.mxu0 0.0
    %1368 = vmatprep.subr.mxu0 0.0
    %1369 = vmatpush1.msra.mxu0 0.0
    %1370 = vmatprep.subr.mxu0 0.0
    %1371 = vmatpush1.msra.mxu0 0.0
    %1372 = vmatprep.subr.mxu0 0.0
    %1373 = vmatpush1.msra.mxu0 0.0
    %1374 = vmatprep.subr.mxu0 0.0
    %1375 = vmatpush1.msra.mxu0 0.0
    %1376 = vmatprep.subr.mxu0 0.0
    %1377 = vmatpush1.msra.mxu0 0.0
    %1378 = vmatprep.subr.mxu0 0.0
    %1379 = vmatpush1.msra.mxu0 0.0
    %1380 = vmatprep.subr.mxu0 0.0
    %1381 = vmatpush1.msra.mxu0 0.0
    %1382 = vmatprep.subr.mxu0 0.0
    %1383 = vmatpush1.msra.mxu0 0.0
    %1384 = vmatprep.subr.mxu0 0.0
    %1385 = vmatpush1.msra.mxu0 0.0
    %1386 = vmatprep.subr.mxu0 0.0
    %1387 = vmatpush1.msra.mxu0 0.0
    %1388 = vmatprep.subr.mxu0 0.0
    %1389 = vmatpush1.msra.mxu0 0.0
    %1390 = vmatprep.subr.mxu0 0.0
    %1391 = vmatpush1.msra.mxu0 0.0
    %1392 = vmatprep.subr.mxu0 0.0
    %1393 = vmatpush1.msra.mxu0 0.0
    %1394 = vmatprep.subr.mxu0 0.0
    %1395 = vmatpush1.msra.mxu0 0.0
    %1396 = vmatprep.subr.mxu0 0.0
    %1397 = vmatpush1.msra.mxu0 0.0
    %1398 = vmatprep.subr.mxu0 0.0
    %1399 = vmatpush1.msra.mxu0 0.0
    %1400 = vmatprep.subr.mxu0 0.0
    %1401 = vmatpush1.msra.mxu0 0.0
    %1402 = vmatprep.mubr.f32.mxu0 0.0
    %1403 = vmatmul.mubr.f32.gmra.mrb[0].mxu0 %v1336
    %v1404 = vpop.f32.mrb[0].mxu0
    %v1405 = vadd.f32 0.0, %v1404
    %v1406 = vpop.f32.mrb[0].mxu0
    %1407 = vdwg.mxu0
    %v1408 = vadd.f32 %v1335, %v1405
    %v1409 = vxor.u32 %v1408, 2147483648
    %v1410 = vmul.f32 %v1409, 1.442695
    %v1411 = vpow.pop %v1410
    %v1412 = vadd.f32 %v1411, 1.0
    %v1413 = vrcp.pop %v1412
    %v1414 = vmul.f32 1.0, %v1413
    %v1415 = vtanh.pop %v1408
    %v1416 = vmul.f32 %v1414, %v1214
    %1418 = vrot.lane.b32.xlu0 %v1415, 64
    %v1419 = vpop.permute.xlu0 %1418
    %v1421 = vmul.f32 %v1414, %v1419
    %1423 = vrot.lane.b32.xlu0 %v1421, 32
    %v1424 = vpop.permute.xlu0 %1423
    %v1426 = vadd.f32 %v1416, %v1424
    %v1427 = vtanh.pop %v1426
    %1429 = vrot.lane.b32.xlu0 %v1427, 64
    %v1430 = vpop.permute.xlu0 %1429
    %v1432 = vmul.f32 %v1414, %v1430
    %1434 = vrot.lane.b32.xlu0 %v1432, 32
    %v1435 = vpop.permute.xlu0 %1434
    %1437 = vrot.lane.b32.xlu0 %v1325, 112
    %v1438 = vpop.permute.xlu0 %1437
    %v1440 = vsel %vm278, %v1435, %v1438
    %v1442 = vsel %vm382, %v1440, 0
    %1444 = vmatprep.subr.mxu0 0.0
    %1445 = vmatpush1.msra.mxu0 %v264
    %1446 = vmatprep.subr.mxu0 0.0
    %1447 = vmatpush1.msra.mxu0 %v265
    %1448 = vmatprep.subr.mxu0 0.0
    %1449 = vmatpush1.msra.mxu0 %v266
    %1450 = vmatprep.subr.mxu0 0.0
    %1451 = vmatpush1.msra.mxu0 %v267
    %1452 = vmatprep.subr.mxu0 0.0
    %1453 = vmatpush1.msra.mxu0 %v268
    %1454 = vmatprep.subr.mxu0 0.0
    %1455 = vmatpush1.msra.mxu0 %v269
    %1456 = vmatprep.subr.mxu0 0.0
    %1457 = vmatpush1.msra.mxu0 0.0
    %1458 = vmatprep.subr.mxu0 0.0
    %1459 = vmatpush1.msra.mxu0 0.0
    %1460 = vmatprep.subr.mxu0 0.0
    %1461 = vmatpush1.msra.mxu0 0.0
    %1462 = vmatprep.subr.mxu0 0.0
    %1463 = vmatpush1.msra.mxu0 0.0
    %1464 = vmatprep.subr.mxu0 0.0
    %1465 = vmatpush1.msra.mxu0 0.0
    %1466 = vmatprep.subr.mxu0 0.0
    %1467 = vmatpush1.msra.mxu0 0.0
    %1468 = vmatprep.subr.mxu0 0.0
    %1469 = vmatpush1.msra.mxu0 0.0
    %1470 = vmatprep.subr.mxu0 0.0
    %1471 = vmatpush1.msra.mxu0 0.0
    %1472 = vmatprep.subr.mxu0 0.0
    %1473 = vmatpush1.msra.mxu0 0.0
    %1474 = vmatprep.subr.mxu0 0.0
    %1475 = vmatpush1.msra.mxu0 0.0
    %1476 = vmatprep.subr.mxu0 0.0
    %1477 = vmatpush1.msra.mxu0 0.0
    %1478 = vmatprep.subr.mxu0 0.0
    %1479 = vmatpush1.msra.mxu0 0.0
    %1480 = vmatprep.subr.mxu0 0.0
    %1481 = vmatpush1.msra.mxu0 0.0
    %1482 = vmatprep.subr.mxu0 0.0
    %1483 = vmatpush1.msra.mxu0 0.0
    %1484 = vmatprep.subr.mxu0 0.0
    %1485 = vmatpush1.msra.mxu0 0.0
    %1486 = vmatprep.subr.mxu0 0.0
    %1487 = vmatpush1.msra.mxu0 0.0
    %1488 = vmatprep.subr.mxu0 0.0
    %1489 = vmatpush1.msra.mxu0 0.0
    %1490 = vmatprep.subr.mxu0 0.0
    %1491 = vmatpush1.msra.mxu0 0.0
    %1492 = vmatprep.subr.mxu0 0.0
    %1493 = vmatpush1.msra.mxu0 0.0
    %1494 = vmatprep.subr.mxu0 0.0
    %1495 = vmatpush1.msra.mxu0 0.0
    %1496 = vmatprep.subr.mxu0 0.0
    %1497 = vmatpush1.msra.mxu0 0.0
    %1498 = vmatprep.subr.mxu0 0.0
    %1499 = vmatpush1.msra.mxu0 0.0
    %1500 = vmatprep.subr.mxu0 0.0
    %1501 = vmatpush1.msra.mxu0 0.0
    %1502 = vmatprep.subr.mxu0 0.0
    %1503 = vmatpush1.msra.mxu0 0.0
    %1504 = vmatprep.subr.mxu0 0.0
    %1505 = vmatpush1.msra.mxu0 0.0
    %1506 = vmatprep.subr.mxu0 0.0
    %1507 = vmatpush1.msra.mxu0 0.0
    %1508 = vmatprep.mubr.f32.mxu0 0.0
    %1509 = vmatmul.mubr.f32.gmra.mrb[0].mxu0 %v1442
    %v1510 = vpop.f32.mrb[0].mxu0
    %v1511 = vadd.f32 %v275, %v1510
    %v1512 = vpop.f32.mrb[0].mxu0
    %1513 = vdwg.mxu0
    %v1514 = vxor.u32 %v1511, 2147483648
    %v1515 = vmul.f32 %v1514, 1.442695
    %v1516 = vpow.pop %v1515
    %v1517 = vadd.f32 %v1516, 1.0
    %v1518 = vrcp.pop %v1517
    %v1519 = vmul.f32 1.0, %v1518
    %v1520 = vtanh.pop %v1511
    %v1521 = vmul.f32 %v1519, %v1319
    %1523 = vrot.lane.b32.xlu0 %v1520, 96
    %v1524 = vpop.permute.xlu0 %1523
    %v1526 = vmul.f32 %v1519, %v1524
    %1528 = vrot.lane.b32.xlu0 %v1526, 16
    %v1529 = vpop.permute.xlu0 %1528
    %v1531 = vadd.f32 %v1521, %v1529
    %v1532 = vtanh.pop %v1531
    %1534 = vrot.lane.b32.xlu0 %v1532, 32
    %v1535 = vpop.permute.xlu0 %1534
    %v1537 = vmul.f32 %v1519, %v1535
    %s1538 = scalar_lea.vmem [#allocation14], 40
    %1539 = vst.msk [vmem:[%s1538] sm:$0xff] %vm278, %v1435
    %1541 = vrot.lane.b32.xlu0 %v1537, 80
    %v1542 = vpop.permute.xlu0 %1541
    %s1544 = scalar_lea.vmem [#allocation15], 40
    %1545 = vst.msk [vmem:[%s1544] sm:$0xff] %vm122, %v1542
    %s1546 = scalar_lea.vmem [#allocation2], 48
    %v1547 = vld [vmem:[%s1546] sm:$0xff]
    %v1548 = vsel %vm278, %v1435, 0
    %1550 = vmatprep.subr.mxu0 0.0
    %1551 = vmatpush1.msra.mxu0 %v260
    %1552 = vmatprep.subr.mxu0 0.0
    %1553 = vmatpush1.msra.mxu0 %v261
    %1554 = vmatprep.subr.mxu0 0.0
    %1555 = vmatpush1.msra.mxu0 %v262
    %1556 = vmatprep.subr.mxu0 0.0
    %1557 = vmatpush1.msra.mxu0 %v263
    %1558 = vmatprep.subr.mxu0 0.0
    %1559 = vmatpush1.msra.mxu0 0.0
    %1560 = vmatprep.subr.mxu0 0.0
    %1561 = vmatpush1.msra.mxu0 0.0
    %1562 = vmatprep.subr.mxu0 0.0
    %1563 = vmatpush1.msra.mxu0 0.0
    %1564 = vmatprep.subr.mxu0 0.0
    %1565 = vmatpush1.msra.mxu0 0.0
    %1566 = vmatprep.subr.mxu0 0.0
    %1567 = vmatpush1.msra.mxu0 0.0
    %1568 = vmatprep.subr.mxu0 0.0
    %1569 = vmatpush1.msra.mxu0 0.0
    %1570 = vmatprep.subr.mxu0 0.0
    %1571 = vmatpush1.msra.mxu0 0.0
    %1572 = vmatprep.subr.mxu0 0.0
    %1573 = vmatpush1.msra.mxu0 0.0
    %1574 = vmatprep.subr.mxu0 0.0
    %1575 = vmatpush1.msra.mxu0 0.0
    %1576 = vmatprep.subr.mxu0 0.0
    %1577 = vmatpush1.msra.mxu0 0.0
    %1578 = vmatprep.subr.mxu0 0.0
    %1579 = vmatpush1.msra.mxu0 0.0
    %1580 = vmatprep.subr.mxu0 0.0
    %1581 = vmatpush1.msra.mxu0 0.0
    %1582 = vmatprep.subr.mxu0 0.0
    %1583 = vmatpush1.msra.mxu0 0.0
    %1584 = vmatprep.subr.mxu0 0.0
    %1585 = vmatpush1.msra.mxu0 0.0
    %1586 = vmatprep.subr.mxu0 0.0
    %1587 = vmatpush1.msra.mxu0 0.0
    %1588 = vmatprep.subr.mxu0 0.0
    %1589 = vmatpush1.msra.mxu0 0.0
    %1590 = vmatprep.subr.mxu0 0.0
    %1591 = vmatpush1.msra.mxu0 0.0
    %1592 = vmatprep.subr.mxu0 0.0
    %1593 = vmatpush1.msra.mxu0 0.0
    %1594 = vmatprep.subr.mxu0 0.0
    %1595 = vmatpush1.msra.mxu0 0.0
    %1596 = vmatprep.subr.mxu0 0.0
    %1597 = vmatpush1.msra.mxu0 0.0
    %1598 = vmatprep.subr.mxu0 0.0
    %1599 = vmatpush1.msra.mxu0 0.0
    %1600 = vmatprep.subr.mxu0 0.0
    %1601 = vmatpush1.msra.mxu0 0.0
    %1602 = vmatprep.subr.mxu0 0.0
    %1603 = vmatpush1.msra.mxu0 0.0
    %1604 = vmatprep.subr.mxu0 0.0
    %1605 = vmatpush1.msra.mxu0 0.0
    %1606 = vmatprep.subr.mxu0 0.0
    %1607 = vmatpush1.msra.mxu0 0.0
    %1608 = vmatprep.subr.mxu0 0.0
    %1609 = vmatpush1.msra.mxu0 0.0
    %1610 = vmatprep.subr.mxu0 0.0
    %1611 = vmatpush1.msra.mxu0 0.0
    %1612 = vmatprep.subr.mxu0 0.0
    %1613 = vmatpush1.msra.mxu0 0.0
    %1614 = vmatprep.mubr.f32.mxu0 0.0
    %1615 = vmatmul.mubr.f32.gmra.mrb[0].mxu0 %v1548
    %v1616 = vpop.f32.mrb[0].mxu0
    %v1617 = vadd.f32 0.0, %v1616
    %v1618 = vpop.f32.mrb[0].mxu0
    %1619 = vdwg.mxu0
    %v1620 = vadd.f32 %v1547, %v1617
    %v1621 = vxor.u32 %v1620, 2147483648
    %v1622 = vmul.f32 %v1621, 1.442695
    %v1623 = vpow.pop %v1622
    %v1624 = vadd.f32 %v1623, 1.0
    %v1625 = vrcp.pop %v1624
    %v1626 = vmul.f32 1.0, %v1625
    %v1627 = vtanh.pop %v1620
    %v1628 = vmul.f32 %v1626, %v1426
    %1630 = vrot.lane.b32.xlu0 %v1627, 64
    %v1631 = vpop.permute.xlu0 %1630
    %v1633 = vmul.f32 %v1626, %v1631
    %1635 = vrot.lane.b32.xlu0 %v1633, 32
    %v1636 = vpop.permute.xlu0 %1635
    %v1638 = vadd.f32 %v1628, %v1636
    %v1639 = vtanh.pop %v1638
    %1641 = vrot.lane.b32.xlu0 %v1639, 64
    %v1642 = vpop.permute.xlu0 %1641
    %v1644 = vmul.f32 %v1626, %v1642
    %1646 = vrot.lane.b32.xlu0 %v1644, 32
    %v1647 = vpop.permute.xlu0 %1646
    %1649 = vrot.lane.b32.xlu0 %v1537, 112
    %v1650 = vpop.permute.xlu0 %1649
    %v1652 = vsel %vm278, %v1647, %v1650
    %v1654 = vsel %vm382, %v1652, 0
    %1656 = vmatprep.subr.mxu0 0.0
    %1657 = vmatpush1.msra.mxu0 %v264
    %1658 = vmatprep.subr.mxu0 0.0
    %1659 = vmatpush1.msra.mxu0 %v265
    %1660 = vmatprep.subr.mxu0 0.0
    %1661 = vmatpush1.msra.mxu0 %v266
    %1662 = vmatprep.subr.mxu0 0.0
    %1663 = vmatpush1.msra.mxu0 %v267
    %1664 = vmatprep.subr.mxu0 0.0
    %1665 = vmatpush1.msra.mxu0 %v268
    %1666 = vmatprep.subr.mxu0 0.0
    %1667 = vmatpush1.msra.mxu0 %v269
    %1668 = vmatprep.subr.mxu0 0.0
    %1669 = vmatpush1.msra.mxu0 0.0
    %1670 = vmatprep.subr.mxu0 0.0
    %1671 = vmatpush1.msra.mxu0 0.0
    %1672 = vmatprep.subr.mxu0 0.0
    %1673 = vmatpush1.msra.mxu0 0.0
    %1674 = vmatprep.subr.mxu0 0.0
    %1675 = vmatpush1.msra.mxu0 0.0
    %1676 = vmatprep.subr.mxu0 0.0
    %1677 = vmatpush1.msra.mxu0 0.0
    %1678 = vmatprep.subr.mxu0 0.0
    %1679 = vmatpush1.msra.mxu0 0.0
    %1680 = vmatprep.subr.mxu0 0.0
    %1681 = vmatpush1.msra.mxu0 0.0
    %1682 = vmatprep.subr.mxu0 0.0
    %1683 = vmatpush1.msra.mxu0 0.0
    %1684 = vmatprep.subr.mxu0 0.0
    %1685 = vmatpush1.msra.mxu0 0.0
    %1686 = vmatprep.subr.mxu0 0.0
    %1687 = vmatpush1.msra.mxu0 0.0
    %1688 = vmatprep.subr.mxu0 0.0
    %1689 = vmatpush1.msra.mxu0 0.0
    %1690 = vmatprep.subr.mxu0 0.0
    %1691 = vmatpush1.msra.mxu0 0.0
    %1692 = vmatprep.subr.mxu0 0.0
    %1693 = vmatpush1.msra.mxu0 0.0
    %1694 = vmatprep.subr.mxu0 0.0
    %1695 = vmatpush1.msra.mxu0 0.0
    %1696 = vmatprep.subr.mxu0 0.0
    %1697 = vmatpush1.msra.mxu0 0.0
    %1698 = vmatprep.subr.mxu0 0.0
    %1699 = vmatpush1.msra.mxu0 0.0
    %1700 = vmatprep.subr.mxu0 0.0
    %1701 = vmatpush1.msra.mxu0 0.0
    %1702 = vmatprep.subr.mxu0 0.0
    %1703 = vmatpush1.msra.mxu0 0.0
    %1704 = vmatprep.subr.mxu0 0.0
    %1705 = vmatpush1.msra.mxu0 0.0
    %1706 = vmatprep.subr.mxu0 0.0
    %1707 = vmatpush1.msra.mxu0 0.0
    %1708 = vmatprep.subr.mxu0 0.0
    %1709 = vmatpush1.msra.mxu0 0.0
    %1710 = vmatprep.subr.mxu0 0.0
    %1711 = vmatpush1.msra.mxu0 0.0
    %1712 = vmatprep.subr.mxu0 0.0
    %1713 = vmatpush1.msra.mxu0 0.0
    %1714 = vmatprep.subr.mxu0 0.0
    %1715 = vmatpush1.msra.mxu0 0.0
    %1716 = vmatprep.subr.mxu0 0.0
    %1717 = vmatpush1.msra.mxu0 0.0
    %1718 = vmatprep.subr.mxu0 0.0
    %1719 = vmatpush1.msra.mxu0 0.0
    %1720 = vmatprep.mubr.f32.mxu0 0.0
    %1721 = vmatmul.mubr.f32.gmra.mrb[0].mxu0 %v1654
    %v1722 = vpop.f32.mrb[0].mxu0
    %v1723 = vadd.f32 %v275, %v1722
    %v1724 = vpop.f32.mrb[0].mxu0
    %1725 = vdwg.mxu0
    %v1726 = vxor.u32 %v1723, 2147483648
    %v1727 = vmul.f32 %v1726, 1.442695
    %v1728 = vpow.pop %v1727
    %v1729 = vadd.f32 %v1728, 1.0
    %v1730 = vrcp.pop %v1729
    %v1731 = vmul.f32 1.0, %v1730
    %v1732 = vtanh.pop %v1723
    %v1733 = vmul.f32 %v1731, %v1531
    %1735 = vrot.lane.b32.xlu0 %v1732, 96
    %v1736 = vpop.permute.xlu0 %1735
    %v1738 = vmul.f32 %v1731, %v1736
    %1740 = vrot.lane.b32.xlu0 %v1738, 16
    %v1741 = vpop.permute.xlu0 %1740
    %v1743 = vadd.f32 %v1733, %v1741
    %v1744 = vtanh.pop %v1743
    %1746 = vrot.lane.b32.xlu0 %v1744, 32
    %v1747 = vpop.permute.xlu0 %1746
    %v1749 = vmul.f32 %v1731, %v1747
    %s1750 = scalar_lea.vmem [#allocation14], 48
    %1751 = vst.msk [vmem:[%s1750] sm:$0xff] %vm278, %v1647
    %1753 = vrot.lane.b32.xlu0 %v1749, 80
    %v1754 = vpop.permute.xlu0 %1753
    %s1756 = scalar_lea.vmem [#allocation15], 48
    %1757 = vst.msk [vmem:[%s1756] sm:$0xff] %vm122, %v1754
    %s1758 = scalar_lea.vmem [#allocation2], 56
    %v1759 = vld [vmem:[%s1758] sm:$0xff]
    %v1760 = vsel %vm278, %v1647, 0
    %1762 = vmatprep.subr.mxu0 0.0
    %1763 = vmatpush1.msra.mxu0 %v260
    %1764 = vmatprep.subr.mxu0 0.0
    %1765 = vmatpush1.msra.mxu0 %v261
    %1766 = vmatprep.subr.mxu0 0.0
    %1767 = vmatpush1.msra.mxu0 %v262
    %1768 = vmatprep.subr.mxu0 0.0
    %1769 = vmatpush1.msra.mxu0 %v263
    %1770 = vmatprep.subr.mxu0 0.0
    %1771 = vmatpush1.msra.mxu0 0.0
    %1772 = vmatprep.subr.mxu0 0.0
    %1773 = vmatpush1.msra.mxu0 0.0
    %1774 = vmatprep.subr.mxu0 0.0
    %1775 = vmatpush1.msra.mxu0 0.0
    %1776 = vmatprep.subr.mxu0 0.0
    %1777 = vmatpush1.msra.mxu0 0.0
    %1778 = vmatprep.subr.mxu0 0.0
    %1779 = vmatpush1.msra.mxu0 0.0
    %1780 = vmatprep.subr.mxu0 0.0
    %1781 = vmatpush1.msra.mxu0 0.0
    %1782 = vmatprep.subr.mxu0 0.0
    %1783 = vmatpush1.msra.mxu0 0.0
    %1784 = vmatprep.subr.mxu0 0.0
    %1785 = vmatpush1.msra.mxu0 0.0
    %1786 = vmatprep.subr.mxu0 0.0
    %1787 = vmatpush1.msra.mxu0 0.0
    %1788 = vmatprep.subr.mxu0 0.0
    %1789 = vmatpush1.msra.mxu0 0.0
    %1790 = vmatprep.subr.mxu0 0.0
    %1791 = vmatpush1.msra.mxu0 0.0
    %1792 = vmatprep.subr.mxu0 0.0
    %1793 = vmatpush1.msra.mxu0 0.0
    %1794 = vmatprep.subr.mxu0 0.0
    %1795 = vmatpush1.msra.mxu0 0.0
    %1796 = vmatprep.subr.mxu0 0.0
    %1797 = vmatpush1.msra.mxu0 0.0
    %1798 = vmatprep.subr.mxu0 0.0
    %1799 = vmatpush1.msra.mxu0 0.0
    %1800 = vmatprep.subr.mxu0 0.0
    %1801 = vmatpush1.msra.mxu0 0.0
    %1802 = vmatprep.subr.mxu0 0.0
    %1803 = vmatpush1.msra.mxu0 0.0
    %1804 = vmatprep.subr.mxu0 0.0
    %1805 = vmatpush1.msra.mxu0 0.0
    %1806 = vmatprep.subr.mxu0 0.0
    %1807 = vmatpush1.msra.mxu0 0.0
    %1808 = vmatprep.subr.mxu0 0.0
    %1809 = vmatpush1.msra.mxu0 0.0
    %1810 = vmatprep.subr.mxu0 0.0
    %1811 = vmatpush1.msra.mxu0 0.0
    %1812 = vmatprep.subr.mxu0 0.0
    %1813 = vmatpush1.msra.mxu0 0.0
    %1814 = vmatprep.subr.mxu0 0.0
    %1815 = vmatpush1.msra.mxu0 0.0
    %1816 = vmatprep.subr.mxu0 0.0
    %1817 = vmatpush1.msra.mxu0 0.0
    %1818 = vmatprep.subr.mxu0 0.0
    %1819 = vmatpush1.msra.mxu0 0.0
    %1820 = vmatprep.subr.mxu0 0.0
    %1821 = vmatpush1.msra.mxu0 0.0
    %1822 = vmatprep.subr.mxu0 0.0
    %1823 = vmatpush1.msra.mxu0 0.0
    %1824 = vmatprep.subr.mxu0 0.0
    %1825 = vmatpush1.msra.mxu0 0.0
    %1826 = vmatprep.mubr.f32.mxu0 0.0
    %1827 = vmatmul.mubr.f32.gmra.mrb[0].mxu0 %v1760
    %v1828 = vpop.f32.mrb[0].mxu0
    %v1829 = vadd.f32 0.0, %v1828
    %v1830 = vpop.f32.mrb[0].mxu0
    %1831 = vdwg.mxu0
    %v1832 = vadd.f32 %v1759, %v1829
    %v1833 = vxor.u32 %v1832, 2147483648
    %v1834 = vmul.f32 %v1833, 1.442695
    %v1835 = vpow.pop %v1834
    %v1836 = vadd.f32 %v1835, 1.0
    %v1837 = vrcp.pop %v1836
    %v1838 = vmul.f32 1.0, %v1837
    %v1839 = vtanh.pop %v1832
    %v1840 = vmul.f32 %v1838, %v1638
    %1842 = vrot.lane.b32.xlu0 %v1839, 64
    %v1843 = vpop.permute.xlu0 %1842
    %v1845 = vmul.f32 %v1838, %v1843
    %1847 = vrot.lane.b32.xlu0 %v1845, 32
    %v1848 = vpop.permute.xlu0 %1847
    %v1850 = vadd.f32 %v1840, %v1848
    %v1851 = vtanh.pop %v1850
    %1853 = vrot.lane.b32.xlu0 %v1851, 64
    %v1854 = vpop.permute.xlu0 %1853
    %v1856 = vmul.f32 %v1838, %v1854
    %1858 = vrot.lane.b32.xlu0 %v1856, 32
    %v1859 = vpop.permute.xlu0 %1858
    %1861 = vrot.lane.b32.xlu0 %v1749, 112
    %v1862 = vpop.permute.xlu0 %1861
    %v1864 = vsel %vm278, %v1859, %v1862
    %v1866 = vsel %vm382, %v1864, 0
    %1868 = vmatprep.subr.mxu0 0.0
    %1869 = vmatpush1.msra.mxu0 %v264
    %1870 = vmatprep.subr.mxu0 0.0
    %1871 = vmatpush1.msra.mxu0 %v265
    %1872 = vmatprep.subr.mxu0 0.0
    %1873 = vmatpush1.msra.mxu0 %v266
    %1874 = vmatprep.subr.mxu0 0.0
    %1875 = vmatpush1.msra.mxu0 %v267
    %1876 = vmatprep.subr.mxu0 0.0
    %1877 = vmatpush1.msra.mxu0 %v268
    %1878 = vmatprep.subr.mxu0 0.0
    %1879 = vmatpush1.msra.mxu0 %v269
    %1880 = vmatprep.subr.mxu0 0.0
    %1881 = vmatpush1.msra.mxu0 0.0
    %1882 = vmatprep.subr.mxu0 0.0
    %1883 = vmatpush1.msra.mxu0 0.0
    %1884 = vmatprep.subr.mxu0 0.0
    %1885 = vmatpush1.msra.mxu0 0.0
    %1886 = vmatprep.subr.mxu0 0.0
    %1887 = vmatpush1.msra.mxu0 0.0
    %1888 = vmatprep.subr.mxu0 0.0
    %1889 = vmatpush1.msra.mxu0 0.0
    %1890 = vmatprep.subr.mxu0 0.0
    %1891 = vmatpush1.msra.mxu0 0.0
    %1892 = vmatprep.subr.mxu0 0.0
    %1893 = vmatpush1.msra.mxu0 0.0
    %1894 = vmatprep.subr.mxu0 0.0
    %1895 = vmatpush1.msra.mxu0 0.0
    %1896 = vmatprep.subr.mxu0 0.0
    %1897 = vmatpush1.msra.mxu0 0.0
    %1898 = vmatprep.subr.mxu0 0.0
    %1899 = vmatpush1.msra.mxu0 0.0
    %1900 = vmatprep.subr.mxu0 0.0
    %1901 = vmatpush1.msra.mxu0 0.0
    %1902 = vmatprep.subr.mxu0 0.0
    %1903 = vmatpush1.msra.mxu0 0.0
    %1904 = vmatprep.subr.mxu0 0.0
    %1905 = vmatpush1.msra.mxu0 0.0
    %1906 = vmatprep.subr.mxu0 0.0
    %1907 = vmatpush1.msra.mxu0 0.0
    %1908 = vmatprep.subr.mxu0 0.0
    %1909 = vmatpush1.msra.mxu0 0.0
    %1910 = vmatprep.subr.mxu0 0.0
    %1911 = vmatpush1.msra.mxu0 0.0
    %1912 = vmatprep.subr.mxu0 0.0
    %1913 = vmatpush1.msra.mxu0 0.0
    %1914 = vmatprep.subr.mxu0 0.0
    %1915 = vmatpush1.msra.mxu0 0.0
    %1916 = vmatprep.subr.mxu0 0.0
    %1917 = vmatpush1.msra.mxu0 0.0
    %1918 = vmatprep.subr.mxu0 0.0
    %1919 = vmatpush1.msra.mxu0 0.0
    %1920 = vmatprep.subr.mxu0 0.0
    %1921 = vmatpush1.msra.mxu0 0.0
    %1922 = vmatprep.subr.mxu0 0.0
    %1923 = vmatpush1.msra.mxu0 0.0
    %1924 = vmatprep.subr.mxu0 0.0
    %1925 = vmatpush1.msra.mxu0 0.0
    %1926 = vmatprep.subr.mxu0 0.0
    %1927 = vmatpush1.msra.mxu0 0.0
    %1928 = vmatprep.subr.mxu0 0.0
    %1929 = vmatpush1.msra.mxu0 0.0
    %1930 = vmatprep.subr.mxu0 0.0
    %1931 = vmatpush1.msra.mxu0 0.0
    %1932 = vmatprep.mubr.f32.mxu0 0.0
    %1933 = vmatmul.mubr.f32.gmra.mrb[0].mxu0 %v1866
    %v1934 = vpop.f32.mrb[0].mxu0
    %v1935 = vadd.f32 %v275, %v1934
    %v1936 = vpop.f32.mrb[0].mxu0
    %1937 = vdwg.mxu0
    %v1938 = vxor.u32 %v1935, 2147483648
    %v1939 = vmul.f32 %v1938, 1.442695
    %v1940 = vpow.pop %v1939
    %v1941 = vadd.f32 %v1940, 1.0
    %v1942 = vrcp.pop %v1941
    %v1943 = vmul.f32 1.0, %v1942
    %v1944 = vtanh.pop %v1935
    %v1945 = vmul.f32 %v1943, %v1743
    %1947 = vrot.lane.b32.xlu0 %v1944, 96
    %v1948 = vpop.permute.xlu0 %1947
    %v1950 = vmul.f32 %v1943, %v1948
    %1952 = vrot.lane.b32.xlu0 %v1950, 16
    %v1953 = vpop.permute.xlu0 %1952
    %v1955 = vadd.f32 %v1945, %v1953
    %v1956 = vtanh.pop %v1955
    %1958 = vrot.lane.b32.xlu0 %v1956, 32
    %v1959 = vpop.permute.xlu0 %1958
    %v1961 = vmul.f32 %v1943, %v1959
    %s1962 = scalar_lea.vmem [#allocation14], 56
    %1963 = vst.msk [vmem:[%s1962] sm:$0xff] %vm278, %v1859
    %1965 = vrot.lane.b32.xlu0 %v1961, 80
    %v1966 = vpop.permute.xlu0 %1965
    %s1968 = scalar_lea.vmem [#allocation15], 56
    %1969 = vst.msk [vmem:[%s1968] sm:$0xff] %vm122, %v1966
    // Predicated region
    $region50: #{contractive_lstm_autoencoder.1} parent=1 // pred_check
      _
    $region51: #{contractive_lstm_autoencoder.1} parent=1 // pred_check_branch
      %1971 = sbr.rel (0) target = $region53
    $region52: #{contractive_lstm_autoencoder.1} parent=1 // pred_region
      %s1973 = ssub.s32 1024, 1024
      %1974 = vsyncadd [#allocation5], %s1973
      %s1975 = sshll.u32 [#allocation14], 4
      %s1976 = int_to_ptr.vmem [resolvable:$true] %s1975
      %1981 = dma.vmem_to_hbm [thread:$0]  %s1976, 1024, %s6, [#allocation5], 128, 128, 8
    $region53: #{contractive_lstm_autoencoder.1} parent=1 // pred_fallthru
      _
    // Predicated region
    $region54: #{contractive_lstm_autoencoder.1} parent=1 // pred_check
      _
    $region55: #{contractive_lstm_autoencoder.1} parent=1 // pred_check_branch
      %1983 = sbr.rel (0) target = $region57
    $region56: #{contractive_lstm_autoencoder.1} parent=1 // pred_region
      %s1985 = ssub.s32 1024, 1024
      %1986 = vsyncadd [#allocation16], %s1985
      %s1987 = sshll.u32 [#allocation15], 4
      %s1988 = int_to_ptr.vmem [resolvable:$true] %s1987
      %1993 = dma.vmem_to_hbm [thread:$0]  %s1988, 1024, %s7, [#allocation16], 128, 128, 8
    $region57: #{contractive_lstm_autoencoder.1} parent=1 // pred_fallthru
      _
    // Predicated region
    $region58: #{contractive_lstm_autoencoder.1} parent=1 // pred_check
      _
    $region59: #{contractive_lstm_autoencoder.1} parent=1 // pred_check_branch
      %1995 = sbr.rel (0) target = $region61
    $region60: #{contractive_lstm_autoencoder.1} parent=1 // pred_region
      %1996 = dma.done [#allocation5], 1024
    $region61: #{contractive_lstm_autoencoder.1} parent=1 // pred_fallthru
      _
    // Predicated region
    $region62: #{contractive_lstm_autoencoder.1} parent=1 // pred_check
      _
    $region63: #{contractive_lstm_autoencoder.1} parent=1 // pred_check_branch
      %1998 = sbr.rel (0) target = $region65
    $region64: #{contractive_lstm_autoencoder.1} parent=1 // pred_region
      %1999 = dma.done [#allocation16], 1024
    $region65: #{contractive_lstm_autoencoder.1} parent=1 // pred_fallthru
      _
    %2000 = vsyncpa [#allocation4], 1
    %2001 = vsyncpa [#allocation7], 1
    %2002 = vsyncpa [#allocation10], 1
    %2003 = vsyncpa [#allocation13], 1
    %2004 = vsyncpa [#allocation5], 1
    %2005 = vsyncpa [#allocation16], 1

</llo_original>
